<compile_context>
chip_gen: v6e
topology: v6e:2x2x1
jax: 0.10.0
libtpu: 0.0.40
codegen_flags: <defaults>
</compile_context>

<pallas_src>
import math
import jax
import jax.numpy as jnp
from jax import lax
from jax.experimental import pallas as pl
from jax.experimental.pallas import tpu as pltpu

# ----- static config (small, consistent with the module) -----
N = 2          # batch
L = 8          # seq_len (power of two -> same-sequence mask via bitwise AND)
E = 32         # emb_dim
H = 4          # n_head
D = E // H     # head dim
F = 64         # ffn_dim
EPS = 1e-5     # norm_eps
NL = N * L     # batch folded into rows

assert L & (L - 1) == 0, "mask construction assumes L is a power of two"

_SQRT_HALF = 1.0 / math.sqrt(2.0)
_NEG_INF = -1e30   # finite large-negative additive mask


def _erf_poly(x):
    # Abramowitz & Stegun 7.1.26 polynomial erf (|err| < 1.5e-7).  Used instead of
    # lax.erf so the kernel only relies on exp/mul/add/where inside Mosaic.
    a1, a2, a3, a4, a5 = (0.254829592, -0.284496736, 1.421413741,
                          -1.453152027, 1.061405429)
    p = 0.3275911
    ax = jnp.abs(x)
    t = 1.0 / (1.0 + p * ax)
    poly = ((((a5 * t + a4) * t + a3) * t + a2) * t + a1) * t
    y = 1.0 - poly * jnp.exp(-ax * ax)
    return jnp.where(x >= 0.0, y, -y)


def _gelu_exact(x):
    return 0.5 * x * (1.0 + _erf_poly(x * _SQRT_HALF))


def _layernorm(t, g_ref, b_ref):
    mu = jnp.mean(t, axis=-1, keepdims=True)
    var = jnp.mean((t - mu) ** 2, axis=-1, keepdims=True)  # biased, like torch LayerNorm
    return (t - mu) * lax.rsqrt(var + EPS) * g_ref[...] + b_ref[...]


def transformer_block_kernel(
    x_ref,                      # (NL, E) batch folded into rows
    g1_ref, b1_ref,             # LayerNorm 1   (1, E)
    wqkv_ref, bqkv_ref,         # qkv proj      (E, 3E), (1, 3E)
    wo_ref, bo_ref,             # attn out proj (E, E), (1, E)
    g2_ref, b2_ref,             # LayerNorm 2   (1, E)
    w1_ref, bf1_ref,            # fc1           (E, F), (1, F)
    w2_ref, bf2_ref,            # fc2           (F, E), (1, E)
    o_ref,                      # (NL, E)
):
    x = x_ref[...]

    # ---- pre-norm (residual adds the *normalized* x, exactly as the module does) ----
    xn = _layernorm(x, g1_ref, b1_ref)

    # ---- QKV projection: one (NL,E)@(E,3E) matmul for all rows / batches ----
    qkv = jnp.dot(xn, wqkv_ref[...], preferred_element_type=jnp.float32) + bqkv_ref[...]

    # Per-head stacks (H, NL, D).  Slices are contiguous D-lane blocks; the stack is
    # along the leading (untiled) axis, not a lane-axis concat.
    heads = jnp.stack([qkv[:, i * D:(i + 1) * D] for i in range(3 * H)], axis=0)
    qh = heads[0:H]            # (H, NL, D)
    kh = heads[H:2 * H]        # (H, NL, D)
    vh = heads[2 * H:3 * H]    # (H, NL, D)

    # ---- batched scores: contraction over last dims (no kh.T transpose) ----
    scale = 1.0 / math.sqrt(D)
    s = jnp.einsum("hnd,hmd->hnm", qh, kh,
                   preferred_element_type=jnp.float32) * scale   # (H, NL, NL)

    # Block-diagonal causal mask: same sequence AND key pos <= query pos.
    row = lax.broadcasted_iota(jnp.int32, (NL, NL), 0)
    col = lax.broadcasted_iota(jnp.int32, (NL, NL), 1)
    same_seq = (row & (-L)) == (col & (-L))          # L is a power of two
    allowed = jnp.logical_and(same_seq, col <= row)
    mask_bias = jnp.where(allowed, 0.0, _NEG_INF)    # finite additive mask
    s = s + mask_bias[None, :, :]

    # ---- one softmax over the whole (H, NL, NL) tensor ----
    s = s - jnp.max(s, axis=-1, keepdims=True)
    p = jnp.exp(s)
    inv = pl.reciprocal(jnp.sum(p, axis=-1, keepdims=True), approx=True)
    p = p * inv

    # ---- batched P @ V ----
    z = jnp.einsum("hnm,hmd->hnd", p, vh,
                   preferred_element_type=jnp.float32)           # (H, NL, D)

    # ---- output projection: accumulate per head (no lane-axis concat) ----
    attn = bo_ref[...]                                           # (1, E) broadcasts
    for h in range(H):
        attn = attn + jnp.dot(z[h], wo_ref[h * D:(h + 1) * D, :],
                              preferred_element_type=jnp.float32)

    # ---- first residual ----
    out1 = xn + attn

    # ---- FFN on norm_2(out1) ----
    hn = _layernorm(out1, g2_ref, b2_ref)
    h1 = jnp.dot(hn, w1_ref[...], preferred_element_type=jnp.float32) + bf1_ref[...]
    h1 = _gelu_exact(h1)
    ff = jnp.dot(h1, w2_ref[...], preferred_element_type=jnp.float32) + bf2_ref[...]

    o_ref[...] = out1 + ff


def transformer_block(x, params):
    n, l, e = x.shape
    x2d = x.reshape(n * l, e)                      # fold batch into rows (wrapper-side, free)
    vmem = pl.BlockSpec(memory_space=pltpu.MemorySpace.VMEM)
    out2d = pl.pallas_call(
        transformer_block_kernel,
        out_shape=jax.ShapeDtypeStruct((n * l, e), jnp.float32),
        in_specs=[vmem] * (1 + len(params)),       # whole arrays resident in VMEM
        out_specs=vmem,                            # single invocation, no grid
    )(x2d, *params)
    return out2d.reshape(n, l, e)


# ---------------- pure-JAX reference (mirrors the PyTorch forward) ----------------
def reference_block(x, params):
    (g1, b1, wqkv, bqkv, wo, bo, g2, b2, w1, bf1, w2, bf2) = params

    def ln(t, g, b):
        mu = jnp.mean(t, axis=-1, keepdims=True)
        var = jnp.mean((t - mu) ** 2, axis=-1, keepdims=True)
        return (t - mu) / jnp.sqrt(var + EPS) * g + b

    xn = ln(x, g1[0], b1[0])
    qkv = xn @ wqkv + bqkv[0]
    q, k, v = jnp.split(qkv, 3, axis=-1)
    q = q.reshape(N, L, H, D).transpose(0, 2, 1, 3)
    k = k.reshape(N, L, H, D).transpose(0, 2, 1, 3)
    v = v.reshape(N, L, H, D).transpose(0, 2, 1, 3)
    attn = jnp.einsum("nhld,nhmd->nhlm", q, k) / math.sqrt(D)
    mask = jnp.triu(jnp.ones((L, L), bool), k=1)
    attn = jnp.where(mask[None, None], -jnp.inf, attn)
    attn = jax.nn.softmax(attn, axis=-1)
    z = jnp.einsum("nhlm,nhmd->nhld", attn, v)
    z = z.transpose(0, 2, 1, 3).reshape(N, L, E)
    z = z @ wo + bo[0]
    out1 = xn + z
    hn = ln(out1, g2[0], b2[0])
    h1 = hn @ w1 + bf1[0]
    h1 = 0.5 * h1 * (1.0 + jax.lax.erf(h1 / math.sqrt(2.0)))   # exact GELU
    ff = h1 @ w2 + bf2[0]
    return out1 + ff


if __name__ == "__main__":
    key = jax.random.PRNGKey(0)
    keys = jax.random.split(key, 16)

    x = jax.random.normal(keys[0], (N, L, E), jnp.float32)

    params = (
        1.0 + 0.1 * jax.random.normal(keys[1], (1, E), jnp.float32),   # ln1 gamma
        0.1 * jax.random.normal(keys[2], (1, E), jnp.float32),         # ln1 beta
        0.05 * jax.random.normal(keys[3], (E, 3 * E), jnp.float32),    # qkv weight (in, out)
        0.05 * jax.random.normal(keys[4], (1, 3 * E), jnp.float32),    # qkv bias
        0.05 * jax.random.normal(keys[5], (E, E), jnp.float32),        # attn out weight
        0.05 * jax.random.normal(keys[6], (1, E), jnp.float32),        # attn out bias
        1.0 + 0.1 * jax.random.normal(keys[7], (1, E), jnp.float32),   # ln2 gamma
        0.1 * jax.random.normal(keys[8], (1, E), jnp.float32),         # ln2 beta
        0.05 * jax.random.normal(keys[9], (E, F), jnp.float32),        # fc1 weight
        0.05 * jax.random.normal(keys[10], (1, F), jnp.float32),       # fc1 bias
        0.05 * jax.random.normal(keys[11], (F, E), jnp.float32),       # fc2 weight
        0.05 * jax.random.normal(keys[12], (1, E), jnp.float32),       # fc2 bias
    )

    out = jax.block_until_ready(transformer_block(x, params))
    ref = jax.block_until_ready(reference_block(x, params))

    assert out.shape == (N, L, E)
    assert jnp.allclose(out, ref, atol=2e-3, rtol=2e-3), "mismatch vs reference"

    print("KERNEL_OK")
</pallas_src>

<mosaic_0001>
module attributes {stable_mosaic.version = 11 : i64} {
  func.func @transformer_block_kernel(%arg0: memref<16x32xf32, #tpu.memory_space<vmem>>, %arg1: memref<1x32xf32, #tpu.memory_space<vmem>>, %arg2: memref<1x32xf32, #tpu.memory_space<vmem>>, %arg3: memref<32x96xf32, #tpu.memory_space<vmem>>, %arg4: memref<1x96xf32, #tpu.memory_space<vmem>>, %arg5: memref<32x32xf32, #tpu.memory_space<vmem>>, %arg6: memref<1x32xf32, #tpu.memory_space<vmem>>, %arg7: memref<1x32xf32, #tpu.memory_space<vmem>>, %arg8: memref<1x32xf32, #tpu.memory_space<vmem>>, %arg9: memref<32x64xf32, #tpu.memory_space<vmem>>, %arg10: memref<1x64xf32, #tpu.memory_space<vmem>>, %arg11: memref<64x32xf32, #tpu.memory_space<vmem>>, %arg12: memref<1x32xf32, #tpu.memory_space<vmem>>, %arg13: memref<16x32xf32, #tpu.memory_space<vmem>>) attributes {dimension_semantics = [], scalar_prefetch = 0 : i64, scratch_operands = 0 : i64, tpu.core_type = #tpu.core_type<tc>} {
    %c0 = arith.constant 0 : index
    %c0_0 = arith.constant 0 : index
    %0 = vector.load %arg0[%c0, %c0_0] : memref<16x32xf32, #tpu.memory_space<vmem>>, vector<16x32xf32>
    %cst = arith.constant dense<0.000000e+00> : vector<16xf32>
    %1 = vector.multi_reduction <add>, %0, %cst [1] : vector<16x32xf32> to vector<16xf32>
    %2 = vector.shape_cast %1 : vector<16xf32> to vector<16x1xf32>
    %cst_1 = arith.constant 3.200000e+01 : f32
    %3 = vector.broadcast %cst_1 : f32 to vector<16x1xf32>
    %4 = arith.divf %2, %3 : vector<16x1xf32>
    %5 = vector.broadcast %4 : vector<16x1xf32> to vector<16x32xf32>
    %6 = arith.subf %0, %5 : vector<16x32xf32>
    %7 = arith.mulf %6, %6 : vector<16x32xf32>
    %cst_2 = arith.constant dense<0.000000e+00> : vector<16xf32>
    %8 = vector.multi_reduction <add>, %7, %cst_2 [1] : vector<16x32xf32> to vector<16xf32>
    %9 = vector.shape_cast %8 : vector<16xf32> to vector<16x1xf32>
    %cst_3 = arith.constant 3.200000e+01 : f32
    %10 = vector.broadcast %cst_3 : f32 to vector<16x1xf32>
    %11 = arith.divf %9, %10 : vector<16x1xf32>
    %12 = vector.broadcast %4 : vector<16x1xf32> to vector<16x32xf32>
    %13 = arith.subf %0, %12 : vector<16x32xf32>
    %cst_4 = arith.constant 9.99999974E-6 : f32
    %14 = vector.broadcast %cst_4 : f32 to vector<16x1xf32>
    %15 = arith.addf %11, %14 : vector<16x1xf32>
    %16 = math.rsqrt %15 : vector<16x1xf32>
    %17 = vector.broadcast %16 : vector<16x1xf32> to vector<16x32xf32>
    %18 = arith.mulf %13, %17 : vector<16x32xf32>
    %c0_5 = arith.constant 0 : index
    %c0_6 = arith.constant 0 : index
    %19 = vector.load %arg1[%c0_5, %c0_6] : memref<1x32xf32, #tpu.memory_space<vmem>>, vector<1x32xf32>
    %20 = vector.broadcast %19 : vector<1x32xf32> to vector<16x32xf32>
    %21 = arith.mulf %18, %20 : vector<16x32xf32>
    %c0_7 = arith.constant 0 : index
    %c0_8 = arith.constant 0 : index
    %22 = vector.load %arg2[%c0_7, %c0_8] : memref<1x32xf32, #tpu.memory_space<vmem>>, vector<1x32xf32>
    %23 = vector.broadcast %22 : vector<1x32xf32> to vector<16x32xf32>
    %24 = arith.addf %21, %23 : vector<16x32xf32>
    %c0_9 = arith.constant 0 : index
    %c0_10 = arith.constant 0 : index
    %25 = vector.load %arg3[%c0_9, %c0_10] : memref<32x96xf32, #tpu.memory_space<vmem>>, vector<32x96xf32>
    %cst_11 = arith.constant dense<0.000000e+00> : vector<16x96xf32>
    %26 = tpu.matmul %24, %25, %cst_11 {dimension_numbers = #tpu.dot_dimension_numbers<[1], [0], [0], [1], [0, 0, 1, 1], [], []>} : vector<16x32xf32>, vector<32x96xf32>, vector<16x96xf32> -> vector<16x96xf32>
    %c0_12 = arith.constant 0 : index
    %c0_13 = arith.constant 0 : index
    %27 = vector.load %arg4[%c0_12, %c0_13] : memref<1x96xf32, #tpu.memory_space<vmem>>, vector<1x96xf32>
    %28 = vector.broadcast %27 : vector<1x96xf32> to vector<16x96xf32>
    %29 = arith.addf %26, %28 : vector<16x96xf32>
    %30 = vector.extract_strided_slice %29 {offsets = [0, 0], sizes = [16, 8], strides = [1, 1]} : vector<16x96xf32> to vector<16x8xf32>
    %31 = vector.extract_strided_slice %29 {offsets = [0, 8], sizes = [16, 8], strides = [1, 1]} : vector<16x96xf32> to vector<16x8xf32>
    %32 = vector.extract_strided_slice %29 {offsets = [0, 16], sizes = [16, 8], strides = [1, 1]} : vector<16x96xf32> to vector<16x8xf32>
    %33 = vector.extract_strided_slice %29 {offsets = [0, 24], sizes = [16, 8], strides = [1, 1]} : vector<16x96xf32> to vector<16x8xf32>
    %34 = vector.extract_strided_slice %29 {offsets = [0, 32], sizes = [16, 8], strides = [1, 1]} : vector<16x96xf32> to vector<16x8xf32>
    %35 = vector.extract_strided_slice %29 {offsets = [0, 40], sizes = [16, 8], strides = [1, 1]} : vector<16x96xf32> to vector<16x8xf32>
    %36 = vector.extract_strided_slice %29 {offsets = [0, 48], sizes = [16, 8], strides = [1, 1]} : vector<16x96xf32> to vector<16x8xf32>
    %37 = vector.extract_strided_slice %29 {offsets = [0, 56], sizes = [16, 8], strides = [1, 1]} : vector<16x96xf32> to vector<16x8xf32>
    %38 = vector.extract_strided_slice %29 {offsets = [0, 64], sizes = [16, 8], strides = [1, 1]} : vector<16x96xf32> to vector<16x8xf32>
    %39 = vector.extract_strided_slice %29 {offsets = [0, 72], sizes = [16, 8], strides = [1, 1]} : vector<16x96xf32> to vector<16x8xf32>
    %40 = vector.extract_strided_slice %29 {offsets = [0, 80], sizes = [16, 8], strides = [1, 1]} : vector<16x96xf32> to vector<16x8xf32>
    %41 = vector.extract_strided_slice %29 {offsets = [0, 88], sizes = [16, 8], strides = [1, 1]} : vector<16x96xf32> to vector<16x8xf32>
    %42 = vector.shape_cast %30 : vector<16x8xf32> to vector<1x16x8xf32>
    %43 = vector.shape_cast %31 : vector<16x8xf32> to vector<1x16x8xf32>
    %44 = vector.shape_cast %32 : vector<16x8xf32> to vector<1x16x8xf32>
    %45 = vector.shape_cast %33 : vector<16x8xf32> to vector<1x16x8xf32>
    %46 = vector.shape_cast %34 : vector<16x8xf32> to vector<1x16x8xf32>
    %47 = vector.shape_cast %35 : vector<16x8xf32> to vector<1x16x8xf32>
    %48 = vector.shape_cast %36 : vector<16x8xf32> to vector<1x16x8xf32>
    %49 = vector.shape_cast %37 : vector<16x8xf32> to vector<1x16x8xf32>
    %50 = vector.shape_cast %38 : vector<16x8xf32> to vector<1x16x8xf32>
    %51 = vector.shape_cast %39 : vector<16x8xf32> to vector<1x16x8xf32>
    %52 = vector.shape_cast %40 : vector<16x8xf32> to vector<1x16x8xf32>
    %53 = vector.shape_cast %41 : vector<16x8xf32> to vector<1x16x8xf32>
    %54 = tpu.concatenate %42, %43, %44, %45, %46, %47, %48, %49, %50, %51, %52, %53 in 0 : vector<1x16x8xf32>, vector<1x16x8xf32>, vector<1x16x8xf32>, vector<1x16x8xf32>, vector<1x16x8xf32>, vector<1x16x8xf32>, vector<1x16x8xf32>, vector<1x16x8xf32>, vector<1x16x8xf32>, vector<1x16x8xf32>, vector<1x16x8xf32>, vector<1x16x8xf32> -> vector<12x16x8xf32>
    %55 = vector.extract_strided_slice %54 {offsets = [0, 0, 0], sizes = [4, 16, 8], strides = [1, 1, 1]} : vector<12x16x8xf32> to vector<4x16x8xf32>
    %56 = vector.extract_strided_slice %54 {offsets = [4, 0, 0], sizes = [4, 16, 8], strides = [1, 1, 1]} : vector<12x16x8xf32> to vector<4x16x8xf32>
    %57 = vector.extract_strided_slice %54 {offsets = [8, 0, 0], sizes = [4, 16, 8], strides = [1, 1, 1]} : vector<12x16x8xf32> to vector<4x16x8xf32>
    "tpu.trace_start"() <{level = 10 : i32, message = "hnd,hmd->hnm"}> : () -> ()
    %cst_14 = arith.constant dense<0.000000e+00> : vector<4x16x16xf32>
    %58 = tpu.matmul %55, %56, %cst_14 {dimension_numbers = #tpu.dot_dimension_numbers<[2], [2], [1], [1], [0, 0, 0, 1, 1, 1], [0], [0]>} : vector<4x16x8xf32>, vector<4x16x8xf32>, vector<4x16x16xf32> -> vector<4x16x16xf32>
    "tpu.trace_stop"() : () -> ()
    %cst_15 = arith.constant 0.353553385 : f32
    %59 = vector.broadcast %cst_15 : f32 to vector<4x16x16xf32>
    %60 = arith.mulf %58, %59 : vector<4x16x16xf32>
    %61 = tpu.iota {dimensions = array<i32: 0>} : vector<16x16xi32>
    %62 = tpu.iota {dimensions = array<i32: 1>} : vector<16x16xi32>
    %c-8_i32 = arith.constant -8 : i32
    %63 = vector.broadcast %c-8_i32 : i32 to vector<16x16xi32>
    %64 = arith.andi %61, %63 : vector<16x16xi32>
    %c-8_i32_16 = arith.constant -8 : i32
    %65 = vector.broadcast %c-8_i32_16 : i32 to vector<16x16xi32>
    %66 = arith.andi %62, %65 : vector<16x16xi32>
    %67 = arith.cmpi eq, %64, %66 : vector<16x16xi32>
    %68 = arith.cmpi sle, %62, %61 : vector<16x16xi32>
    %69 = arith.andi %67, %68 : vector<16x16xi1>
    %cst_17 = arith.constant 0.000000e+00 : f32
    %cst_18 = arith.constant -1.000000e+30 : f32
    %70 = vector.broadcast %cst_17 : f32 to vector<16x16xf32>
    %71 = vector.broadcast %cst_18 : f32 to vector<16x16xf32>
    %72 = arith.select %69, %70, %71 : vector<16x16xi1>, vector<16x16xf32>
    %73 = vector.shape_cast %72 : vector<16x16xf32> to vector<1x16x16xf32>
    %74 = vector.broadcast %73 : vector<1x16x16xf32> to vector<4x16x16xf32>
    %75 = arith.addf %60, %74 : vector<4x16x16xf32>
    %cst_19 = arith.constant dense<0xFF800000> : vector<4x16xf32>
    %76 = vector.multi_reduction <maximumf>, %75, %cst_19 [2] : vector<4x16x16xf32> to vector<4x16xf32>
    %77 = vector.shape_cast %76 : vector<4x16xf32> to vector<4x16x1xf32>
    %78 = vector.broadcast %77 : vector<4x16x1xf32> to vector<4x16x16xf32>
    %79 = arith.subf %75, %78 : vector<4x16x16xf32>
    %80 = math.exp %79 : vector<4x16x16xf32>
    %cst_20 = arith.constant dense<0.000000e+00> : vector<4x16xf32>
    %81 = vector.multi_reduction <add>, %80, %cst_20 [2] : vector<4x16x16xf32> to vector<4x16xf32>
    %82 = vector.shape_cast %81 : vector<4x16xf32> to vector<4x16x1xf32>
    %83 = tpu.reciprocal %82 {approx = true} : vector<4x16x1xf32> -> vector<4x16x1xf32>
    %84 = vector.broadcast %83 : vector<4x16x1xf32> to vector<4x16x16xf32>
    %85 = arith.mulf %80, %84 : vector<4x16x16xf32>
    "tpu.trace_start"() <{level = 10 : i32, message = "hnm,hmd->hnd"}> : () -> ()
    %cst_21 = arith.constant dense<0.000000e+00> : vector<4x16x8xf32>
    %86 = tpu.matmul %85, %57, %cst_21 {dimension_numbers = #tpu.dot_dimension_numbers<[2], [1], [1], [2], [0, 0, 0, 1, 1, 2], [0], [0]>} : vector<4x16x16xf32>, vector<4x16x8xf32>, vector<4x16x8xf32> -> vector<4x16x8xf32>
    "tpu.trace_stop"() : () -> ()
    %c0_22 = arith.constant 0 : index
    %c0_23 = arith.constant 0 : index
    %87 = vector.load %arg6[%c0_22, %c0_23] : memref<1x32xf32, #tpu.memory_space<vmem>>, vector<1x32xf32>
    %88 = vector.extract_strided_slice %86 {offsets = [0, 0, 0], sizes = [1, 16, 8], strides = [1, 1, 1]} : vector<4x16x8xf32> to vector<1x16x8xf32>
    %89 = vector.shape_cast %88 : vector<1x16x8xf32> to vector<16x8xf32>
    %c0_24 = arith.constant 0 : index
    %c0_25 = arith.constant 0 : index
    %90 = vector.load %arg5[%c0_24, %c0_25] : memref<32x32xf32, #tpu.memory_space<vmem>>, vector<8x32xf32>
    %cst_26 = arith.constant dense<0.000000e+00> : vector<16x32xf32>
    %91 = tpu.matmul %89, %90, %cst_26 {dimension_numbers = #tpu.dot_dimension_numbers<[1], [0], [0], [1], [0, 0, 1, 1], [], []>} : vector<16x8xf32>, vector<8x32xf32>, vector<16x32xf32> -> vector<16x32xf32>
    %92 = vector.broadcast %87 : vector<1x32xf32> to vector<16x32xf32>
    %93 = arith.addf %92, %91 : vector<16x32xf32>
    %94 = vector.extract_strided_slice %86 {offsets = [1, 0, 0], sizes = [1, 16, 8], strides = [1, 1, 1]} : vector<4x16x8xf32> to vector<1x16x8xf32>
    %95 = vector.shape_cast %94 : vector<1x16x8xf32> to vector<16x8xf32>
    %c8 = arith.constant 8 : index
    %c0_27 = arith.constant 0 : index
    %96 = vector.load %arg5[%c8, %c0_27] : memref<32x32xf32, #tpu.memory_space<vmem>>, vector<8x32xf32>
    %cst_28 = arith.constant dense<0.000000e+00> : vector<16x32xf32>
    %97 = tpu.matmul %95, %96, %cst_28 {dimension_numbers = #tpu.dot_dimension_numbers<[1], [0], [0], [1], [0, 0, 1, 1], [], []>} : vector<16x8xf32>, vector<8x32xf32>, vector<16x32xf32> -> vector<16x32xf32>
    %98 = arith.addf %93, %97 : vector<16x32xf32>
    %99 = vector.extract_strided_slice %86 {offsets = [2, 0, 0], sizes = [1, 16, 8], strides = [1, 1, 1]} : vector<4x16x8xf32> to vector<1x16x8xf32>
    %100 = vector.shape_cast %99 : vector<1x16x8xf32> to vector<16x8xf32>
    %c16 = arith.constant 16 : index
    %c0_29 = arith.constant 0 : index
    %101 = vector.load %arg5[%c16, %c0_29] : memref<32x32xf32, #tpu.memory_space<vmem>>, vector<8x32xf32>
    %cst_30 = arith.constant dense<0.000000e+00> : vector<16x32xf32>
    %102 = tpu.matmul %100, %101, %cst_30 {dimension_numbers = #tpu.dot_dimension_numbers<[1], [0], [0], [1], [0, 0, 1, 1], [], []>} : vector<16x8xf32>, vector<8x32xf32>, vector<16x32xf32> -> vector<16x32xf32>
    %103 = arith.addf %98, %102 : vector<16x32xf32>
    %104 = vector.extract_strided_slice %86 {offsets = [3, 0, 0], sizes = [1, 16, 8], strides = [1, 1, 1]} : vector<4x16x8xf32> to vector<1x16x8xf32>
    %105 = vector.shape_cast %104 : vector<1x16x8xf32> to vector<16x8xf32>
    %c24 = arith.constant 24 : index
    %c0_31 = arith.constant 0 : index
    %106 = vector.load %arg5[%c24, %c0_31] : memref<32x32xf32, #tpu.memory_space<vmem>>, vector<8x32xf32>
    %cst_32 = arith.constant dense<0.000000e+00> : vector<16x32xf32>
    %107 = tpu.matmul %105, %106, %cst_32 {dimension_numbers = #tpu.dot_dimension_numbers<[1], [0], [0], [1], [0, 0, 1, 1], [], []>} : vector<16x8xf32>, vector<8x32xf32>, vector<16x32xf32> -> vector<16x32xf32>
    %108 = arith.addf %103, %107 : vector<16x32xf32>
    %109 = arith.addf %24, %108 : vector<16x32xf32>
    %cst_33 = arith.constant dense<0.000000e+00> : vector<16xf32>
    %110 = vector.multi_reduction <add>, %109, %cst_33 [1] : vector<16x32xf32> to vector<16xf32>
    %111 = vector.shape_cast %110 : vector<16xf32> to vector<16x1xf32>
    %cst_34 = arith.constant 3.200000e+01 : f32
    %112 = vector.broadcast %cst_34 : f32 to vector<16x1xf32>
    %113 = arith.divf %111, %112 : vector<16x1xf32>
    %114 = vector.broadcast %113 : vector<16x1xf32> to vector<16x32xf32>
    %115 = arith.subf %109, %114 : vector<16x32xf32>
    %116 = arith.mulf %115, %115 : vector<16x32xf32>
    %cst_35 = arith.constant dense<0.000000e+00> : vector<16xf32>
    %117 = vector.multi_reduction <add>, %116, %cst_35 [1] : vector<16x32xf32> to vector<16xf32>
    %118 = vector.shape_cast %117 : vector<16xf32> to vector<16x1xf32>
    %cst_36 = arith.constant 3.200000e+01 : f32
    %119 = vector.broadcast %cst_36 : f32 to vector<16x1xf32>
    %120 = arith.divf %118, %119 : vector<16x1xf32>
    %121 = vector.broadcast %113 : vector<16x1xf32> to vector<16x32xf32>
    %122 = arith.subf %109, %121 : vector<16x32xf32>
    %cst_37 = arith.constant 9.99999974E-6 : f32
    %123 = vector.broadcast %cst_37 : f32 to vector<16x1xf32>
    %124 = arith.addf %120, %123 : vector<16x1xf32>
    %125 = math.rsqrt %124 : vector<16x1xf32>
    %126 = vector.broadcast %125 : vector<16x1xf32> to vector<16x32xf32>
    %127 = arith.mulf %122, %126 : vector<16x32xf32>
    %c0_38 = arith.constant 0 : index
    %c0_39 = arith.constant 0 : index
    %128 = vector.load %arg7[%c0_38, %c0_39] : memref<1x32xf32, #tpu.memory_space<vmem>>, vector<1x32xf32>
    %129 = vector.broadcast %128 : vector<1x32xf32> to vector<16x32xf32>
    %130 = arith.mulf %127, %129 : vector<16x32xf32>
    %c0_40 = arith.constant 0 : index
    %c0_41 = arith.constant 0 : index
    %131 = vector.load %arg8[%c0_40, %c0_41] : memref<1x32xf32, #tpu.memory_space<vmem>>, vector<1x32xf32>
    %132 = vector.broadcast %131 : vector<1x32xf32> to vector<16x32xf32>
    %133 = arith.addf %130, %132 : vector<16x32xf32>
    %c0_42 = arith.constant 0 : index
    %c0_43 = arith.constant 0 : index
    %134 = vector.load %arg9[%c0_42, %c0_43] : memref<32x64xf32, #tpu.memory_space<vmem>>, vector<32x64xf32>
    %cst_44 = arith.constant dense<0.000000e+00> : vector<16x64xf32>
    %135 = tpu.matmul %133, %134, %cst_44 {dimension_numbers = #tpu.dot_dimension_numbers<[1], [0], [0], [1], [0, 0, 1, 1], [], []>} : vector<16x32xf32>, vector<32x64xf32>, vector<16x64xf32> -> vector<16x64xf32>
    %c0_45 = arith.constant 0 : index
    %c0_46 = arith.constant 0 : index
    %136 = vector.load %arg10[%c0_45, %c0_46] : memref<1x64xf32, #tpu.memory_space<vmem>>, vector<1x64xf32>
    %137 = vector.broadcast %136 : vector<1x64xf32> to vector<16x64xf32>
    %138 = arith.addf %135, %137 : vector<16x64xf32>
    %cst_47 = arith.constant 5.000000e-01 : f32
    %139 = vector.broadcast %cst_47 : f32 to vector<16x64xf32>
    %140 = arith.mulf %139, %138 : vector<16x64xf32>
    %cst_48 = arith.constant 0.707106769 : f32
    %141 = vector.broadcast %cst_48 : f32 to vector<16x64xf32>
    %142 = arith.mulf %138, %141 : vector<16x64xf32>
    %143 = math.absf %142 : vector<16x64xf32>
    %cst_49 = arith.constant 0.327591091 : f32
    %144 = vector.broadcast %cst_49 : f32 to vector<16x64xf32>
    %145 = arith.mulf %144, %143 : vector<16x64xf32>
    %cst_50 = arith.constant 1.000000e+00 : f32
    %146 = vector.broadcast %cst_50 : f32 to vector<16x64xf32>
    %147 = arith.addf %146, %145 : vector<16x64xf32>
    %cst_51 = arith.constant 1.000000e+00 : f32
    %148 = vector.broadcast %cst_51 : f32 to vector<16x64xf32>
    %149 = arith.divf %148, %147 : vector<16x64xf32>
    %cst_52 = arith.constant 1.06140542 : f32
    %150 = vector.broadcast %cst_52 : f32 to vector<16x64xf32>
    %151 = arith.mulf %150, %149 : vector<16x64xf32>
    %cst_53 = arith.constant -1.45315206 : f32
    %152 = vector.broadcast %cst_53 : f32 to vector<16x64xf32>
    %153 = arith.addf %151, %152 : vector<16x64xf32>
    %154 = arith.mulf %153, %149 : vector<16x64xf32>
    %cst_54 = arith.constant 1.42141378 : f32
    %155 = vector.broadcast %cst_54 : f32 to vector<16x64xf32>
    %156 = arith.addf %154, %155 : vector<16x64xf32>
    %157 = arith.mulf %156, %149 : vector<16x64xf32>
    %cst_55 = arith.constant -0.284496725 : f32
    %158 = vector.broadcast %cst_55 : f32 to vector<16x64xf32>
    %159 = arith.addf %157, %158 : vector<16x64xf32>
    %160 = arith.mulf %159, %149 : vector<16x64xf32>
    %cst_56 = arith.constant 0.254829586 : f32
    %161 = vector.broadcast %cst_56 : f32 to vector<16x64xf32>
    %162 = arith.addf %160, %161 : vector<16x64xf32>
    %163 = arith.mulf %162, %149 : vector<16x64xf32>
    %cst_57 = arith.constant 0.000000e+00 : f32
    %164 = vector.broadcast %cst_57 : f32 to vector<16x64xf32>
    %165 = arith.subf %164, %143 : vector<16x64xf32>
    %166 = arith.mulf %165, %143 : vector<16x64xf32>
    %167 = math.exp %166 : vector<16x64xf32>
    %168 = arith.mulf %163, %167 : vector<16x64xf32>
    %cst_58 = arith.constant 1.000000e+00 : f32
    %169 = vector.broadcast %cst_58 : f32 to vector<16x64xf32>
    %170 = arith.subf %169, %168 : vector<16x64xf32>
    %cst_59 = arith.constant 0.000000e+00 : f32
    %171 = vector.broadcast %cst_59 : f32 to vector<16x64xf32>
    %172 = arith.cmpf oge, %142, %171 : vector<16x64xf32>
    %cst_60 = arith.constant 0.000000e+00 : f32
    %173 = vector.broadcast %cst_60 : f32 to vector<16x64xf32>
    %174 = arith.subf %173, %170 : vector<16x64xf32>
    %175 = arith.select %172, %170, %174 : vector<16x64xi1>, vector<16x64xf32>
    %cst_61 = arith.constant 1.000000e+00 : f32
    %176 = vector.broadcast %cst_61 : f32 to vector<16x64xf32>
    %177 = arith.addf %176, %175 : vector<16x64xf32>
    %178 = arith.mulf %140, %177 : vector<16x64xf32>
    %c0_62 = arith.constant 0 : index
    %c0_63 = arith.constant 0 : index
    %179 = vector.load %arg11[%c0_62, %c0_63] : memref<64x32xf32, #tpu.memory_space<vmem>>, vector<64x32xf32>
    %cst_64 = arith.constant dense<0.000000e+00> : vector<16x32xf32>
    %180 = tpu.matmul %178, %179, %cst_64 {dimension_numbers = #tpu.dot_dimension_numbers<[1], [0], [0], [1], [0, 0, 1, 1], [], []>} : vector<16x64xf32>, vector<64x32xf32>, vector<16x32xf32> -> vector<16x32xf32>
    %c0_65 = arith.constant 0 : index
    %c0_66 = arith.constant 0 : index
    %181 = vector.load %arg12[%c0_65, %c0_66] : memref<1x32xf32, #tpu.memory_space<vmem>>, vector<1x32xf32>
    %182 = vector.broadcast %181 : vector<1x32xf32> to vector<16x32xf32>
    %183 = arith.addf %180, %182 : vector<16x32xf32>
    %184 = arith.addf %109, %183 : vector<16x32xf32>
    %c0_67 = arith.constant 0 : index
    %c0_68 = arith.constant 0 : index
    %185 = vector.load %arg13[%c0_67, %c0_68] : memref<16x32xf32, #tpu.memory_space<vmem>>, vector<16x32xf32>
    tpu.vector_store %arg13[%c0_67, %c0_68], %184 {strides = array<i32>} : memref<16x32xf32, #tpu.memory_space<vmem>>, vector<16x32xf32>,
    return
  }
}

</mosaic_0001>

<llo_original>
// kernel: tpu_custom_call.1
$region0: #{tpu_custom_call.1}
  #allocation0 [shape = 'u32[]', space=smem, size = 0x4, offset = 0x4, fixed_abs, tag = 'smem constant byte address 0x4 - core index']
  #allocation1 [shape = 'u32[144,128]{1,0:T(1,128)}', space=vmem, size = 0x12000, scoped, tag = 'internal scratch']
  %s0 = inlined_call_operand.hbm [shape: f32[16,32], index: 0, kind: input, shape index: {}]
  %s1 = inlined_call_operand.vmem [shape: f32[1,32], index: 1, kind: input, shape index: {}]
  %s2 = inlined_call_operand.vmem [shape: f32[1,32], index: 2, kind: input, shape index: {}]
  %s3 = inlined_call_operand.vmem [shape: f32[32,96], index: 3, kind: input, shape index: {}]
  %s4 = inlined_call_operand.vmem [shape: f32[1,96], index: 4, kind: input, shape index: {}]
  %s5 = inlined_call_operand.vmem [shape: f32[32,32], index: 5, kind: input, shape index: {}]
  %s6 = inlined_call_operand.vmem [shape: f32[1,32], index: 6, kind: input, shape index: {}]
  %s7 = inlined_call_operand.vmem [shape: f32[1,32], index: 7, kind: input, shape index: {}]
  %s8 = inlined_call_operand.vmem [shape: f32[1,32], index: 8, kind: input, shape index: {}]
  %s9 = inlined_call_operand.vmem [shape: f32[32,64], index: 9, kind: input, shape index: {}]
  %s10 = inlined_call_operand.vmem [shape: f32[1,64], index: 10, kind: input, shape index: {}]
  %s11 = inlined_call_operand.vmem [shape: f32[64,32], index: 11, kind: input, shape index: {}]
  %s12 = inlined_call_operand.vmem [shape: f32[1,32], index: 12, kind: input, shape index: {}]
  %s13 = inlined_call_operand.hbm [shape: f32[16,32], index: 13, kind: output, shape index: {}]
  %s14 = sld [smem:[#allocation0]]
  $region66: #{tpu_custom_call.1} parent=0
    _
  %s16 = ssub.s32 1, %s14
  %s17 = scalar_select 0, %s16, %s14
  $region1: #{tpu_custom_call.1} parent=0
    #allocation2 [shape = 'u8[8192]{0}', space=vmem, size = 0x2000, scoped, tag = 'input window, operand 0, single buffered']
    #allocation3 [shape = 's32[1]{0}', space=sflag, size = 0x4, scoped, tag = 'scoped memory for tpu_custom_call.1']
    #allocation4 [shape = 's32[1]{0}', space=sflag, size = 0x4, scoped, tag = 'scoped memory for tpu_custom_call.1']
    #allocation5 [shape = 'u8[8192]{0}', space=vmem, size = 0x2000, scoped, tag = 'output window, operand 0, single buffered']
    %18 = vsyncpa [#allocation3], 0
    %19 = vsyncpa [#allocation4], 0
    // Predicated region
    $region2: #{tpu_custom_call.1} parent=1 // pred_check
      _
    $region3: #{tpu_custom_call.1} parent=1 // pred_check_branch
      %21 = sbr.rel (0) target = $region5
    $region4: #{tpu_custom_call.1} parent=1 // pred_region
      %s23 = ssub.s32 256, 256
      %24 = vsyncadd [#allocation3], %s23
      %s25 = sshll.u32 [#allocation2], 4
      %s26 = int_to_ptr.vmem [resolvable:$true] %s25
      %31 = dma.hbm_to_vmem [thread:$0]  %s0, 256, %s26, [#allocation3], 128, 128, 8
    $region5: #{tpu_custom_call.1} parent=1 // pred_fallthru
      _
    // Predicated region
    $region6: #{tpu_custom_call.1} parent=1 // pred_check
      _
    $region7: #{tpu_custom_call.1} parent=1 // pred_check_branch
      %33 = sbr.rel (0) target = $region9
    $region8: #{tpu_custom_call.1} parent=1 // pred_region
      _
    $region9: #{tpu_custom_call.1} parent=1 // pred_fallthru
      _
    // Predicated region
    $region10: #{tpu_custom_call.1} parent=1 // pred_check
      _
    $region11: #{tpu_custom_call.1} parent=1 // pred_check_branch
      %35 = sbr.rel (0) target = $region13
    $region12: #{tpu_custom_call.1} parent=1 // pred_region
      _
    $region13: #{tpu_custom_call.1} parent=1 // pred_fallthru
      _
    // Predicated region
    $region14: #{tpu_custom_call.1} parent=1 // pred_check
      _
    $region15: #{tpu_custom_call.1} parent=1 // pred_check_branch
      %37 = sbr.rel (0) target = $region17
    $region16: #{tpu_custom_call.1} parent=1 // pred_region
      _
    $region17: #{tpu_custom_call.1} parent=1 // pred_fallthru
      _
    // Predicated region
    $region18: #{tpu_custom_call.1} parent=1 // pred_check
      _
    $region19: #{tpu_custom_call.1} parent=1 // pred_check_branch
      %39 = sbr.rel (0) target = $region21
    $region20: #{tpu_custom_call.1} parent=1 // pred_region
      _
    $region21: #{tpu_custom_call.1} parent=1 // pred_fallthru
      _
    // Predicated region
    $region22: #{tpu_custom_call.1} parent=1 // pred_check
      _
    $region23: #{tpu_custom_call.1} parent=1 // pred_check_branch
      %41 = sbr.rel (0) target = $region25
    $region24: #{tpu_custom_call.1} parent=1 // pred_region
      _
    $region25: #{tpu_custom_call.1} parent=1 // pred_fallthru
      _
    // Predicated region
    $region26: #{tpu_custom_call.1} parent=1 // pred_check
      _
    $region27: #{tpu_custom_call.1} parent=1 // pred_check_branch
      %43 = sbr.rel (0) target = $region29
    $region28: #{tpu_custom_call.1} parent=1 // pred_region
      _
    $region29: #{tpu_custom_call.1} parent=1 // pred_fallthru
      _
    // Predicated region
    $region30: #{tpu_custom_call.1} parent=1 // pred_check
      _
    $region31: #{tpu_custom_call.1} parent=1 // pred_check_branch
      %45 = sbr.rel (0) target = $region33
    $region32: #{tpu_custom_call.1} parent=1 // pred_region
      _
    $region33: #{tpu_custom_call.1} parent=1 // pred_fallthru
      _
    // Predicated region
    $region34: #{tpu_custom_call.1} parent=1 // pred_check
      _
    $region35: #{tpu_custom_call.1} parent=1 // pred_check_branch
      %47 = sbr.rel (0) target = $region37
    $region36: #{tpu_custom_call.1} parent=1 // pred_region
      _
    $region37: #{tpu_custom_call.1} parent=1 // pred_fallthru
      _
    // Predicated region
    $region38: #{tpu_custom_call.1} parent=1 // pred_check
      _
    $region39: #{tpu_custom_call.1} parent=1 // pred_check_branch
      %49 = sbr.rel (0) target = $region41
    $region40: #{tpu_custom_call.1} parent=1 // pred_region
      _
    $region41: #{tpu_custom_call.1} parent=1 // pred_fallthru
      _
    // Predicated region
    $region42: #{tpu_custom_call.1} parent=1 // pred_check
      _
    $region43: #{tpu_custom_call.1} parent=1 // pred_check_branch
      %51 = sbr.rel (0) target = $region45
    $region44: #{tpu_custom_call.1} parent=1 // pred_region
      _
    $region45: #{tpu_custom_call.1} parent=1 // pred_fallthru
      _
    // Predicated region
    $region46: #{tpu_custom_call.1} parent=1 // pred_check
      _
    $region47: #{tpu_custom_call.1} parent=1 // pred_check_branch
      %53 = sbr.rel (0) target = $region49
    $region48: #{tpu_custom_call.1} parent=1 // pred_region
      _
    $region49: #{tpu_custom_call.1} parent=1 // pred_fallthru
      _
    // Predicated region
    $region50: #{tpu_custom_call.1} parent=1 // pred_check
      _
    $region51: #{tpu_custom_call.1} parent=1 // pred_check_branch
      %55 = sbr.rel (0) target = $region53
    $region52: #{tpu_custom_call.1} parent=1 // pred_region
      _
    $region53: #{tpu_custom_call.1} parent=1 // pred_fallthru
      _
    // Predicated region
    $region54: #{tpu_custom_call.1} parent=1 // pred_check
      _
    $region55: #{tpu_custom_call.1} parent=1 // pred_check_branch
      %57 = sbr.rel (0) target = $region57
    $region56: #{tpu_custom_call.1} parent=1 // pred_region
      %58 = dma.done [#allocation3], 256
    $region57: #{tpu_custom_call.1} parent=1 // pred_fallthru
      _
    %v59 = vld [vmem:[#allocation2] sm:$0xff]
    %v60 = vld [vmem:[#allocation2 + $0x8] sm:$0xff]
    %vm61 = vcmask 261120
    %v62 = vsel %vm61, %v59, 0.0
    %63 = vadd.xlane.f32.xlu0 %v62
    %v64 = vpop.xlane.xlu0 %63
    %v65 = vsel %vm61, %v60, 0.0
    %66 = vadd.xlane.f32.xlu0 %v65
    %v67 = vpop.xlane.xlu0 %66
    %v68 = vrcp.pop 32.0
    %v69 = vmul.f32 %v64, %v68
    %v70 = vmul.f32 %v67, %v68
    %v71 = vsub.f32 %v59, %v69
    %v72 = vsub.f32 %v60, %v70
    %v73 = vmul.f32 %v71, %v71
    %v74 = vmul.f32 %v72, %v72
    %v75 = vsel %vm61, %v73, 0.0
    %76 = vadd.xlane.f32.xlu0 %v75
    %v77 = vpop.xlane.xlu0 %76
    %v78 = vsel %vm61, %v74, 0.0
    %79 = vadd.xlane.f32.xlu0 %v78
    %v80 = vpop.xlane.xlu0 %79
    %v81 = vmul.f32 %v77, %v68
    %v82 = vmul.f32 %v80, %v68
    %v83 = vadd.f32 %v81, 1e-05
    %v84 = vadd.f32 %v82, 1e-05
    %v85 = vrsqrt.pop %v83
    %v86 = vrsqrt.pop %v84
    %v87 = vmul.f32 %v71, %v85
    %v88 = vmul.f32 %v72, %v86
    %v89 = vld [vmem:[%s1] sm:$0x1]
    %v91 = vlaneseq
    %v92 = vshrl.u32 %v91, 7
    %v93 = vsub.s32 0, %v92
    %v94 = vrot.slane %v89, %v93
    %v96 = vmul.f32 %v87, %v94
    %v97 = vmul.f32 %v88, %v94
    %v98 = vld [vmem:[%s2] sm:$0x1]
    %v100 = vlaneseq
    %v101 = vshrl.u32 %v100, 7
    %v102 = vsub.s32 0, %v101
    %v103 = vrot.slane %v98, %v102
    %v105 = vadd.f32 %v96, %v103
    %v106 = vadd.f32 %v97, %v103
    %v107 = vld [vmem:[%s3] sm:$0xff]
    %v108 = vld [vmem:[%s3 + $0x8] sm:$0xff]
    %v109 = vld [vmem:[%s3 + $0x10] sm:$0xff]
    %v110 = vld [vmem:[%s3 + $0x18] sm:$0xff]
    %v111 = vld [vmem:[%s4] sm:$0x1]
    %v113 = vlaneseq
    %v114 = vshrl.u32 %v113, 7
    %v115 = vsub.s32 0, %v114
    %v116 = vrot.slane %v111, %v115
    %v119 = vsel %vm61, %v105, 0
    %v122 = vsel %vm61, %v106, 0
    %124 = vmatprep.subr.mxu0 0.0
    %125 = vmatpush1.msra.mxu0 0.0
    %126 = vmatprep.subr.mxu0 0.0
    %127 = vmatpush1.msra.mxu0 0.0
    %128 = vmatprep.subr.mxu0 0.0
    %129 = vmatpush1.msra.mxu0 0.0
    %130 = vmatprep.subr.mxu0 0.0
    %131 = vmatpush1.msra.mxu0 0.0
    %132 = vmatprep.subr.mxu0 0.0
    %133 = vmatpush1.msra.mxu0 0.0
    %134 = vmatprep.subr.mxu0 0.0
    %135 = vmatpush1.msra.mxu0 0.0
    %136 = vmatprep.subr.mxu0 0.0
    %137 = vmatpush1.msra.mxu0 0.0
    %138 = vmatprep.subr.mxu0 0.0
    %139 = vmatpush1.msra.mxu0 0.0
    %140 = vmatprep.subr.mxu0 0.0
    %141 = vmatpush1.msra.mxu0 0.0
    %142 = vmatprep.subr.mxu0 0.0
    %143 = vmatpush1.msra.mxu0 0.0
    %144 = vmatprep.subr.mxu0 0.0
    %145 = vmatpush1.msra.mxu0 0.0
    %146 = vmatprep.subr.mxu0 0.0
    %147 = vmatpush1.msra.mxu0 0.0
    %148 = vmatprep.subr.mxu0 0.0
    %149 = vmatpush1.msra.mxu0 %v110
    %150 = vmatprep.subr.mxu0 0.0
    %151 = vmatpush1.msra.mxu0 %v109
    %152 = vmatprep.subr.mxu0 0.0
    %153 = vmatpush1.msra.mxu0 %v108
    %154 = vmatprep.subr.mxu0 0.0
    %155 = vmatpush1.msra.mxu0 %v107
    %156 = vmatprep.subr.mxu0 0.0
    %157 = vmatpush2.msra.mxu0 0.0
    %158 = vmatprep.subr.mxu0 0.0
    %159 = vmatpush2.msra.mxu0 0.0
    %160 = vmatprep.subr.mxu0 0.0
    %161 = vmatpush2.msra.mxu0 0.0
    %162 = vmatprep.subr.mxu0 0.0
    %163 = vmatpush2.msra.mxu0 0.0
    %164 = vmatprep.subr.mxu0 0.0
    %165 = vmatpush2.msra.mxu0 0.0
    %166 = vmatprep.subr.mxu0 0.0
    %167 = vmatpush2.msra.mxu0 0.0
    %168 = vmatprep.subr.mxu0 0.0
    %169 = vmatpush2.msra.mxu0 0.0
    %170 = vmatprep.subr.mxu0 0.0
    %171 = vmatpush2.msra.mxu0 0.0
    %172 = vmatprep.subr.mxu0 0.0
    %173 = vmatpush2.msra.mxu0 0.0
    %174 = vmatprep.subr.mxu0 0.0
    %175 = vmatpush2.msra.mxu0 0.0
    %176 = vmatprep.subr.mxu0 0.0
    %177 = vmatpush2.msra.mxu0 0.0
    %178 = vmatprep.subr.mxu0 0.0
    %179 = vmatpush2.msra.mxu0 0.0
    %180 = vmatprep.subr.mxu0 0.0
    %181 = vmatpush2.msra.mxu0 0.0
    %182 = vmatprep.subr.mxu0 0.0
    %183 = vmatpush2.msra.mxu0 0.0
    %184 = vmatprep.subr.mxu0 0.0
    %185 = vmatpush2.msra.mxu0 0.0
    %186 = vmatprep.subr.mxu0 0.0
    %187 = vmatpush2.msra.mxu0 0.0
    %188 = vmatprep.mubr.f32.mxu0 0.0
    %189 = vmatmul.mubr.f32.gmra.mxu0 %v119
    %v190 = vpop.f32.mrf.mxu0
    %v191 = vadd.f32 %v116, %v190
    %v192 = vpop.f32.mrf.mxu0
    %193 = vmatprep.mubr.f32.mxu0 0.0
    %194 = vmatmul.mubr.f32.gmra.mxu0 %v122
    %v195 = vpop.f32.mrf.mxu0
    %v196 = vadd.f32 %v116, %v195
    %v197 = vpop.f32.mrf.mxu0
    %198 = vdwg.mxu0
    %201 = vrot.lane.b32.xlu0 %v191, 120
    %v202 = vpop.permute.xlu0 %201
    %203 = vrot.lane.b32.xlu0 %v196, 120
    %v204 = vpop.permute.xlu0 %203
    %205 = vrot.lane.b32.xlu0 %v191, 112
    %v206 = vpop.permute.xlu0 %205
    %207 = vrot.lane.b32.xlu0 %v196, 112
    %v208 = vpop.permute.xlu0 %207
    %209 = vrot.lane.b32.xlu0 %v191, 104
    %v210 = vpop.permute.xlu0 %209
    %211 = vrot.lane.b32.xlu0 %v196, 104
    %v212 = vpop.permute.xlu0 %211
    %213 = vrot.lane.b32.xlu0 %v191, 96
    %v214 = vpop.permute.xlu0 %213
    %215 = vrot.lane.b32.xlu0 %v196, 96
    %v216 = vpop.permute.xlu0 %215
    %217 = vrot.lane.b32.xlu0 %v191, 88
    %v218 = vpop.permute.xlu0 %217
    %219 = vrot.lane.b32.xlu0 %v196, 88
    %v220 = vpop.permute.xlu0 %219
    %221 = vrot.lane.b32.xlu0 %v191, 80
    %v222 = vpop.permute.xlu0 %221
    %223 = vrot.lane.b32.xlu0 %v196, 80
    %v224 = vpop.permute.xlu0 %223
    %225 = vrot.lane.b32.xlu0 %v191, 72
    %v226 = vpop.permute.xlu0 %225
    %227 = vrot.lane.b32.xlu0 %v196, 72
    %v228 = vpop.permute.xlu0 %227
    %229 = vrot.lane.b32.xlu0 %v191, 64
    %v230 = vpop.permute.xlu0 %229
    %231 = vrot.lane.b32.xlu0 %v196, 64
    %v232 = vpop.permute.xlu0 %231
    %235 = vrot.lane.b32.xlu0 %v191, 56
    %v236 = vpop.permute.xlu0 %235
    %237 = vrot.lane.b32.xlu0 %v196, 56
    %v238 = vpop.permute.xlu0 %237
    %241 = vrot.lane.b32.xlu0 %v191, 48
    %v242 = vpop.permute.xlu0 %241
    %243 = vrot.lane.b32.xlu0 %v196, 48
    %v244 = vpop.permute.xlu0 %243
    %247 = vrot.lane.b32.xlu0 %v191, 40
    %v248 = vpop.permute.xlu0 %247
    %249 = vrot.lane.b32.xlu0 %v196, 40
    %v250 = vpop.permute.xlu0 %249
    %vm253 = vcmask 64512
    %v254 = vsel %vm253, %v191, 0
    %v256 = vsel %vm253, %v196, 0
    %v258 = vsel %vm253, %v214, 0
    %v260 = vsel %vm253, %v216, 0
    %262 = vmatprep.subr.mxu0 0.0
    %263 = vmatpush1.xpose.msra.mxu0 0.0
    %264 = vmatprep.subr.mxu0 0.0
    %265 = vmatpush1.xpose.msra.mxu0 0.0
    %266 = vmatprep.subr.mxu0 0.0
    %267 = vmatpush1.xpose.msra.mxu0 0.0
    %268 = vmatprep.subr.mxu0 0.0
    %269 = vmatpush1.xpose.msra.mxu0 0.0
    %270 = vmatprep.subr.mxu0 0.0
    %271 = vmatpush1.xpose.msra.mxu0 0.0
    %272 = vmatprep.subr.mxu0 0.0
    %273 = vmatpush1.xpose.msra.mxu0 0.0
    %274 = vmatprep.subr.mxu0 0.0
    %275 = vmatpush1.xpose.msra.mxu0 0.0
    %276 = vmatprep.subr.mxu0 0.0
    %277 = vmatpush1.xpose.msra.mxu0 0.0
    %278 = vmatprep.subr.mxu0 0.0
    %279 = vmatpush1.xpose.msra.mxu0 0.0
    %280 = vmatprep.subr.mxu0 0.0
    %281 = vmatpush1.xpose.msra.mxu0 0.0
    %282 = vmatprep.subr.mxu0 0.0
    %283 = vmatpush1.xpose.msra.mxu0 0.0
    %284 = vmatprep.subr.mxu0 0.0
    %285 = vmatpush1.xpose.msra.mxu0 0.0
    %286 = vmatprep.subr.mxu0 0.0
    %287 = vmatpush1.xpose.msra.mxu0 0.0
    %288 = vmatprep.subr.mxu0 0.0
    %289 = vmatpush1.xpose.msra.mxu0 0.0
    %290 = vmatprep.subr.mxu0 0.0
    %291 = vmatpush1.xpose.msra.mxu0 %v260
    %292 = vmatprep.subr.mxu0 0.0
    %293 = vmatpush1.xpose.msra.mxu0 %v258
    %294 = vmatprep.subr.mxu0 0.0
    %295 = vmatpush2.xpose.msra.mxu0 0.0
    %296 = vmatprep.subr.mxu0 0.0
    %297 = vmatpush2.xpose.msra.mxu0 0.0
    %298 = vmatprep.subr.mxu0 0.0
    %299 = vmatpush2.xpose.msra.mxu0 0.0
    %300 = vmatprep.subr.mxu0 0.0
    %301 = vmatpush2.xpose.msra.mxu0 0.0
    %302 = vmatprep.subr.mxu0 0.0
    %303 = vmatpush2.xpose.msra.mxu0 0.0
    %304 = vmatprep.subr.mxu0 0.0
    %305 = vmatpush2.xpose.msra.mxu0 0.0
    %306 = vmatprep.subr.mxu0 0.0
    %307 = vmatpush2.xpose.msra.mxu0 0.0
    %308 = vmatprep.subr.mxu0 0.0
    %309 = vmatpush2.xpose.msra.mxu0 0.0
    %310 = vmatprep.subr.mxu0 0.0
    %311 = vmatpush2.xpose.msra.mxu0 0.0
    %312 = vmatprep.subr.mxu0 0.0
    %313 = vmatpush2.xpose.msra.mxu0 0.0
    %314 = vmatprep.subr.mxu0 0.0
    %315 = vmatpush2.xpose.msra.mxu0 0.0
    %316 = vmatprep.subr.mxu0 0.0
    %317 = vmatpush2.xpose.msra.mxu0 0.0
    %318 = vmatprep.subr.mxu0 0.0
    %319 = vmatpush2.xpose.msra.mxu0 0.0
    %320 = vmatprep.subr.mxu0 0.0
    %321 = vmatpush2.xpose.msra.mxu0 0.0
    %322 = vmatprep.subr.mxu0 0.0
    %323 = vmatpush2.xpose.msra.mxu0 0.0
    %324 = vmatprep.subr.mxu0 0.0
    %325 = vmatpush2.xpose.msra.mxu0 0.0
    %326 = vmatprep.mubr.f32.mxu0 0.0
    %327 = vmatmul.mubr.f32.gmra.mxu0 %v254
    %v328 = vpop.f32.mrf.mxu0
    %v329 = vadd.f32 0.0, %v328
    %v330 = vpop.f32.mrf.mxu0
    %331 = vmatprep.mubr.f32.mxu0 0.0
    %332 = vmatmul.mubr.f32.gmra.mxu0 %v256
    %v333 = vpop.f32.mrf.mxu0
    %v334 = vadd.f32 0.0, %v333
    %v335 = vpop.f32.mrf.mxu0
    %336 = vdwg.mxu0
    %v337 = vsel %vm253, %v202, 0
    %v339 = vsel %vm253, %v204, 0
    %v341 = vsel %vm253, %v218, 0
    %v343 = vsel %vm253, %v220, 0
    %345 = vmatprep.subr.mxu0 0.0
    %346 = vmatpush1.xpose.msra.mxu0 0.0
    %347 = vmatprep.subr.mxu0 0.0
    %348 = vmatpush1.xpose.msra.mxu0 0.0
    %349 = vmatprep.subr.mxu0 0.0
    %350 = vmatpush1.xpose.msra.mxu0 0.0
    %351 = vmatprep.subr.mxu0 0.0
    %352 = vmatpush1.xpose.msra.mxu0 0.0
    %353 = vmatprep.subr.mxu0 0.0
    %354 = vmatpush1.xpose.msra.mxu0 0.0
    %355 = vmatprep.subr.mxu0 0.0
    %356 = vmatpush1.xpose.msra.mxu0 0.0
    %357 = vmatprep.subr.mxu0 0.0
    %358 = vmatpush1.xpose.msra.mxu0 0.0
    %359 = vmatprep.subr.mxu0 0.0
    %360 = vmatpush1.xpose.msra.mxu0 0.0
    %361 = vmatprep.subr.mxu0 0.0
    %362 = vmatpush1.xpose.msra.mxu0 0.0
    %363 = vmatprep.subr.mxu0 0.0
    %364 = vmatpush1.xpose.msra.mxu0 0.0
    %365 = vmatprep.subr.mxu0 0.0
    %366 = vmatpush1.xpose.msra.mxu0 0.0
    %367 = vmatprep.subr.mxu0 0.0
    %368 = vmatpush1.xpose.msra.mxu0 0.0
    %369 = vmatprep.subr.mxu0 0.0
    %370 = vmatpush1.xpose.msra.mxu0 0.0
    %371 = vmatprep.subr.mxu0 0.0
    %372 = vmatpush1.xpose.msra.mxu0 0.0
    %373 = vmatprep.subr.mxu0 0.0
    %374 = vmatpush1.xpose.msra.mxu0 %v343
    %375 = vmatprep.subr.mxu0 0.0
    %376 = vmatpush1.xpose.msra.mxu0 %v341
    %377 = vmatprep.subr.mxu0 0.0
    %378 = vmatpush2.xpose.msra.mxu0 0.0
    %379 = vmatprep.subr.mxu0 0.0
    %380 = vmatpush2.xpose.msra.mxu0 0.0
    %381 = vmatprep.subr.mxu0 0.0
    %382 = vmatpush2.xpose.msra.mxu0 0.0
    %383 = vmatprep.subr.mxu0 0.0
    %384 = vmatpush2.xpose.msra.mxu0 0.0
    %385 = vmatprep.subr.mxu0 0.0
    %386 = vmatpush2.xpose.msra.mxu0 0.0
    %387 = vmatprep.subr.mxu0 0.0
    %388 = vmatpush2.xpose.msra.mxu0 0.0
    %389 = vmatprep.subr.mxu0 0.0
    %390 = vmatpush2.xpose.msra.mxu0 0.0
    %391 = vmatprep.subr.mxu0 0.0
    %392 = vmatpush2.xpose.msra.mxu0 0.0
    %393 = vmatprep.subr.mxu0 0.0
    %394 = vmatpush2.xpose.msra.mxu0 0.0
    %395 = vmatprep.subr.mxu0 0.0
    %396 = vmatpush2.xpose.msra.mxu0 0.0
    %397 = vmatprep.subr.mxu0 0.0
    %398 = vmatpush2.xpose.msra.mxu0 0.0
    %399 = vmatprep.subr.mxu0 0.0
    %400 = vmatpush2.xpose.msra.mxu0 0.0
    %401 = vmatprep.subr.mxu0 0.0
    %402 = vmatpush2.xpose.msra.mxu0 0.0
    %403 = vmatprep.subr.mxu0 0.0
    %404 = vmatpush2.xpose.msra.mxu0 0.0
    %405 = vmatprep.subr.mxu0 0.0
    %406 = vmatpush2.xpose.msra.mxu0 0.0
    %407 = vmatprep.subr.mxu0 0.0
    %408 = vmatpush2.xpose.msra.mxu0 0.0
    %409 = vmatprep.mubr.f32.mxu0 0.0
    %410 = vmatmul.mubr.f32.gmra.mxu0 %v337
    %v411 = vpop.f32.mrf.mxu0
    %v412 = vadd.f32 0.0, %v411
    %v413 = vpop.f32.mrf.mxu0
    %414 = vmatprep.mubr.f32.mxu0 0.0
    %415 = vmatmul.mubr.f32.gmra.mxu0 %v339
    %v416 = vpop.f32.mrf.mxu0
    %v417 = vadd.f32 0.0, %v416
    %v418 = vpop.f32.mrf.mxu0
    %419 = vdwg.mxu0
    %v420 = vsel %vm253, %v206, 0
    %v422 = vsel %vm253, %v208, 0
    %v424 = vsel %vm253, %v222, 0
    %v426 = vsel %vm253, %v224, 0
    %428 = vmatprep.subr.mxu0 0.0
    %429 = vmatpush1.xpose.msra.mxu0 0.0
    %430 = vmatprep.subr.mxu0 0.0
    %431 = vmatpush1.xpose.msra.mxu0 0.0
    %432 = vmatprep.subr.mxu0 0.0
    %433 = vmatpush1.xpose.msra.mxu0 0.0
    %434 = vmatprep.subr.mxu0 0.0
    %435 = vmatpush1.xpose.msra.mxu0 0.0
    %436 = vmatprep.subr.mxu0 0.0
    %437 = vmatpush1.xpose.msra.mxu0 0.0
    %438 = vmatprep.subr.mxu0 0.0
    %439 = vmatpush1.xpose.msra.mxu0 0.0
    %440 = vmatprep.subr.mxu0 0.0
    %441 = vmatpush1.xpose.msra.mxu0 0.0
    %442 = vmatprep.subr.mxu0 0.0
    %443 = vmatpush1.xpose.msra.mxu0 0.0
    %444 = vmatprep.subr.mxu0 0.0
    %445 = vmatpush1.xpose.msra.mxu0 0.0
    %446 = vmatprep.subr.mxu0 0.0
    %447 = vmatpush1.xpose.msra.mxu0 0.0
    %448 = vmatprep.subr.mxu0 0.0
    %449 = vmatpush1.xpose.msra.mxu0 0.0
    %450 = vmatprep.subr.mxu0 0.0
    %451 = vmatpush1.xpose.msra.mxu0 0.0
    %452 = vmatprep.subr.mxu0 0.0
    %453 = vmatpush1.xpose.msra.mxu0 0.0
    %454 = vmatprep.subr.mxu0 0.0
    %455 = vmatpush1.xpose.msra.mxu0 0.0
    %456 = vmatprep.subr.mxu0 0.0
    %457 = vmatpush1.xpose.msra.mxu0 %v426
    %458 = vmatprep.subr.mxu0 0.0
    %459 = vmatpush1.xpose.msra.mxu0 %v424
    %460 = vmatprep.subr.mxu0 0.0
    %461 = vmatpush2.xpose.msra.mxu0 0.0
    %462 = vmatprep.subr.mxu0 0.0
    %463 = vmatpush2.xpose.msra.mxu0 0.0
    %464 = vmatprep.subr.mxu0 0.0
    %465 = vmatpush2.xpose.msra.mxu0 0.0
    %466 = vmatprep.subr.mxu0 0.0
    %467 = vmatpush2.xpose.msra.mxu0 0.0
    %468 = vmatprep.subr.mxu0 0.0
    %469 = vmatpush2.xpose.msra.mxu0 0.0
    %470 = vmatprep.subr.mxu0 0.0
    %471 = vmatpush2.xpose.msra.mxu0 0.0
    %472 = vmatprep.subr.mxu0 0.0
    %473 = vmatpush2.xpose.msra.mxu0 0.0
    %474 = vmatprep.subr.mxu0 0.0
    %475 = vmatpush2.xpose.msra.mxu0 0.0
    %476 = vmatprep.subr.mxu0 0.0
    %477 = vmatpush2.xpose.msra.mxu0 0.0
    %478 = vmatprep.subr.mxu0 0.0
    %479 = vmatpush2.xpose.msra.mxu0 0.0
    %480 = vmatprep.subr.mxu0 0.0
    %481 = vmatpush2.xpose.msra.mxu0 0.0
    %482 = vmatprep.subr.mxu0 0.0
    %483 = vmatpush2.xpose.msra.mxu0 0.0
    %484 = vmatprep.subr.mxu0 0.0
    %485 = vmatpush2.xpose.msra.mxu0 0.0
    %486 = vmatprep.subr.mxu0 0.0
    %487 = vmatpush2.xpose.msra.mxu0 0.0
    %488 = vmatprep.subr.mxu0 0.0
    %489 = vmatpush2.xpose.msra.mxu0 0.0
    %490 = vmatprep.subr.mxu0 0.0
    %491 = vmatpush2.xpose.msra.mxu0 0.0
    %492 = vmatprep.mubr.f32.mxu0 0.0
    %493 = vmatmul.mubr.f32.gmra.mxu0 %v420
    %v494 = vpop.f32.mrf.mxu0
    %v495 = vadd.f32 0.0, %v494
    %v496 = vpop.f32.mrf.mxu0
    %497 = vmatprep.mubr.f32.mxu0 0.0
    %498 = vmatmul.mubr.f32.gmra.mxu0 %v422
    %v499 = vpop.f32.mrf.mxu0
    %v500 = vadd.f32 0.0, %v499
    %v501 = vpop.f32.mrf.mxu0
    %502 = vdwg.mxu0
    %v503 = vsel %vm253, %v210, 0
    %v505 = vsel %vm253, %v212, 0
    %v507 = vsel %vm253, %v226, 0
    %v509 = vsel %vm253, %v228, 0
    %511 = vmatprep.subr.mxu0 0.0
    %512 = vmatpush1.xpose.msra.mxu0 0.0
    %513 = vmatprep.subr.mxu0 0.0
    %514 = vmatpush1.xpose.msra.mxu0 0.0
    %515 = vmatprep.subr.mxu0 0.0
    %516 = vmatpush1.xpose.msra.mxu0 0.0
    %517 = vmatprep.subr.mxu0 0.0
    %518 = vmatpush1.xpose.msra.mxu0 0.0
    %519 = vmatprep.subr.mxu0 0.0
    %520 = vmatpush1.xpose.msra.mxu0 0.0
    %521 = vmatprep.subr.mxu0 0.0
    %522 = vmatpush1.xpose.msra.mxu0 0.0
    %523 = vmatprep.subr.mxu0 0.0
    %524 = vmatpush1.xpose.msra.mxu0 0.0
    %525 = vmatprep.subr.mxu0 0.0
    %526 = vmatpush1.xpose.msra.mxu0 0.0
    %527 = vmatprep.subr.mxu0 0.0
    %528 = vmatpush1.xpose.msra.mxu0 0.0
    %529 = vmatprep.subr.mxu0 0.0
    %530 = vmatpush1.xpose.msra.mxu0 0.0
    %531 = vmatprep.subr.mxu0 0.0
    %532 = vmatpush1.xpose.msra.mxu0 0.0
    %533 = vmatprep.subr.mxu0 0.0
    %534 = vmatpush1.xpose.msra.mxu0 0.0
    %535 = vmatprep.subr.mxu0 0.0
    %536 = vmatpush1.xpose.msra.mxu0 0.0
    %537 = vmatprep.subr.mxu0 0.0
    %538 = vmatpush1.xpose.msra.mxu0 0.0
    %539 = vmatprep.subr.mxu0 0.0
    %540 = vmatpush1.xpose.msra.mxu0 %v509
    %541 = vmatprep.subr.mxu0 0.0
    %542 = vmatpush1.xpose.msra.mxu0 %v507
    %543 = vmatprep.subr.mxu0 0.0
    %544 = vmatpush2.xpose.msra.mxu0 0.0
    %545 = vmatprep.subr.mxu0 0.0
    %546 = vmatpush2.xpose.msra.mxu0 0.0
    %547 = vmatprep.subr.mxu0 0.0
    %548 = vmatpush2.xpose.msra.mxu0 0.0
    %549 = vmatprep.subr.mxu0 0.0
    %550 = vmatpush2.xpose.msra.mxu0 0.0
    %551 = vmatprep.subr.mxu0 0.0
    %552 = vmatpush2.xpose.msra.mxu0 0.0
    %553 = vmatprep.subr.mxu0 0.0
    %554 = vmatpush2.xpose.msra.mxu0 0.0
    %555 = vmatprep.subr.mxu0 0.0
    %556 = vmatpush2.xpose.msra.mxu0 0.0
    %557 = vmatprep.subr.mxu0 0.0
    %558 = vmatpush2.xpose.msra.mxu0 0.0
    %559 = vmatprep.subr.mxu0 0.0
    %560 = vmatpush2.xpose.msra.mxu0 0.0
    %561 = vmatprep.subr.mxu0 0.0
    %562 = vmatpush2.xpose.msra.mxu0 0.0
    %563 = vmatprep.subr.mxu0 0.0
    %564 = vmatpush2.xpose.msra.mxu0 0.0
    %565 = vmatprep.subr.mxu0 0.0
    %566 = vmatpush2.xpose.msra.mxu0 0.0
    %567 = vmatprep.subr.mxu0 0.0
    %568 = vmatpush2.xpose.msra.mxu0 0.0
    %569 = vmatprep.subr.mxu0 0.0
    %570 = vmatpush2.xpose.msra.mxu0 0.0
    %571 = vmatprep.subr.mxu0 0.0
    %572 = vmatpush2.xpose.msra.mxu0 0.0
    %573 = vmatprep.subr.mxu0 0.0
    %574 = vmatpush2.xpose.msra.mxu0 0.0
    %575 = vmatprep.mubr.f32.mxu0 0.0
    %576 = vmatmul.mubr.f32.gmra.mxu0 %v503
    %v577 = vpop.f32.mrf.mxu0
    %v578 = vadd.f32 0.0, %v577
    %v579 = vpop.f32.mrf.mxu0
    %580 = vmatprep.mubr.f32.mxu0 0.0
    %581 = vmatmul.mubr.f32.gmra.mxu0 %v505
    %v582 = vpop.f32.mrf.mxu0
    %v583 = vadd.f32 0.0, %v582
    %v584 = vpop.f32.mrf.mxu0
    %585 = vdwg.mxu0
    %v586 = vmul.f32 %v329, 0.35355338
    %v587 = vmul.f32 %v334, 0.35355338
    %v588 = vmul.f32 %v412, 0.35355338
    %v589 = vmul.f32 %v417, 0.35355338
    %v590 = vmul.f32 %v495, 0.35355338
    %v591 = vmul.f32 %v500, 0.35355338
    %v592 = vmul.f32 %v578, 0.35355338
    %v593 = vmul.f32 %v583, 0.35355338
    %v594 = vlaneseq
    %v595 = vshrl.u32 %v594, 7
    %v596 = vadd.s32 %v595, 8
    %v597 = vlaneseq
    %v598 = vand.u32 %v597, 127
    %v599 = vand.u32 %v595, 4294967288
    %v600 = vand.u32 %v596, 4294967288
    %v601 = vand.u32 %v598, 4294967288
    %vm602 = vcmp.eq.s32.totalorder %v599, %v601
    %vm603 = vcmp.eq.s32.totalorder %v600, %v601
    %vm604 = vcmp.le.s32.totalorder %v598, %v595
    %vm605 = vcmp.le.s32.totalorder %v598, %v596
    %vm606 = vmand %vm602, %vm604
    %vm607 = vmand %vm603, %vm605
    %v608 = vsel %vm606, 0.0, -1e+30
    %v609 = vsel %vm607, 0.0, -1e+30
    %v610 = vadd.f32 %v586, %v608
    %v611 = vadd.f32 %v587, %v609
    %v612 = vadd.f32 %v588, %v608
    %v613 = vadd.f32 %v589, %v609
    %v614 = vadd.f32 %v590, %v608
    %v615 = vadd.f32 %v591, %v609
    %v616 = vadd.f32 %v592, %v608
    %v617 = vadd.f32 %v593, %v609
    %vm618 = vcmask 130048
    %v619 = vsel %vm618, %v610, -inf
    %620 = vmax.xlane.f32.xlu0 %v619
    %v621 = vpop.xlane.xlu0 %620
    %v622 = vsel %vm618, %v611, -inf
    %623 = vmax.xlane.f32.xlu0 %v622
    %v624 = vpop.xlane.xlu0 %623
    %v625 = vsel %vm618, %v612, -inf
    %626 = vmax.xlane.f32.xlu0 %v625
    %v627 = vpop.xlane.xlu0 %626
    %v628 = vsel %vm618, %v613, -inf
    %629 = vmax.xlane.f32.xlu0 %v628
    %v630 = vpop.xlane.xlu0 %629
    %v631 = vsel %vm618, %v614, -inf
    %632 = vmax.xlane.f32.xlu0 %v631
    %v633 = vpop.xlane.xlu0 %632
    %v634 = vsel %vm618, %v615, -inf
    %635 = vmax.xlane.f32.xlu0 %v634
    %v636 = vpop.xlane.xlu0 %635
    %v637 = vsel %vm618, %v616, -inf
    %638 = vmax.xlane.f32.xlu0 %v637
    %v639 = vpop.xlane.xlu0 %638
    %v640 = vsel %vm618, %v617, -inf
    %641 = vmax.xlane.f32.xlu0 %v640
    %v642 = vpop.xlane.xlu0 %641
    %v643 = vsub.f32 %v610, %v621
    %v644 = vsub.f32 %v611, %v624
    %v645 = vsub.f32 %v612, %v627
    %v646 = vsub.f32 %v613, %v630
    %v647 = vsub.f32 %v614, %v633
    %v648 = vsub.f32 %v615, %v636
    %v649 = vsub.f32 %v616, %v639
    %v650 = vsub.f32 %v617, %v642
    %v651 = vmul.f32 %v643, 1.442695
    %v652 = vpow.pop %v651
    %v653 = vmul.f32 %v644, 1.442695
    %v654 = vpow.pop %v653
    %v655 = vmul.f32 %v645, 1.442695
    %v656 = vpow.pop %v655
    %v657 = vmul.f32 %v646, 1.442695
    %v658 = vpow.pop %v657
    %v659 = vmul.f32 %v647, 1.442695
    %v660 = vpow.pop %v659
    %v661 = vmul.f32 %v648, 1.442695
    %v662 = vpow.pop %v661
    %v663 = vmul.f32 %v649, 1.442695
    %v664 = vpow.pop %v663
    %v665 = vmul.f32 %v650, 1.442695
    %v666 = vpow.pop %v665
    %v667 = vsel %vm618, %v652, 0.0
    %668 = vadd.xlane.f32.xlu0 %v667
    %v669 = vpop.xlane.xlu0 %668
    %v670 = vsel %vm618, %v654, 0.0
    %671 = vadd.xlane.f32.xlu0 %v670
    %v672 = vpop.xlane.xlu0 %671
    %v673 = vsel %vm618, %v656, 0.0
    %674 = vadd.xlane.f32.xlu0 %v673
    %v675 = vpop.xlane.xlu0 %674
    %v676 = vsel %vm618, %v658, 0.0
    %677 = vadd.xlane.f32.xlu0 %v676
    %v678 = vpop.xlane.xlu0 %677
    %v679 = vsel %vm618, %v660, 0.0
    %680 = vadd.xlane.f32.xlu0 %v679
    %v681 = vpop.xlane.xlu0 %680
    %v682 = vsel %vm618, %v662, 0.0
    %683 = vadd.xlane.f32.xlu0 %v682
    %v684 = vpop.xlane.xlu0 %683
    %v685 = vsel %vm618, %v664, 0.0
    %686 = vadd.xlane.f32.xlu0 %v685
    %v687 = vpop.xlane.xlu0 %686
    %v688 = vsel %vm618, %v666, 0.0
    %689 = vadd.xlane.f32.xlu0 %v688
    %v690 = vpop.xlane.xlu0 %689
    %v691 = vrcp.pop %v669
    %v692 = vrcp.pop %v672
    %v693 = vrcp.pop %v675
    %v694 = vrcp.pop %v678
    %v695 = vrcp.pop %v681
    %v696 = vrcp.pop %v684
    %v697 = vrcp.pop %v687
    %v698 = vrcp.pop %v690
    %v699 = vmul.f32 %v652, %v691
    %v700 = vmul.f32 %v654, %v692
    %v701 = vmul.f32 %v656, %v693
    %v702 = vmul.f32 %v658, %v694
    %v703 = vmul.f32 %v660, %v695
    %v704 = vmul.f32 %v662, %v696
    %v705 = vmul.f32 %v664, %v697
    %v706 = vmul.f32 %v666, %v698
    %v708 = vsel %vm618, %v699, 0
    %v711 = vsel %vm618, %v700, 0
    %713 = vmatprep.subr.mxu0 0.0
    %714 = vmatpush1.msra.mxu0 0.0
    %715 = vmatprep.subr.mxu0 0.0
    %716 = vmatpush1.msra.mxu0 0.0
    %717 = vmatprep.subr.mxu0 0.0
    %718 = vmatpush1.msra.mxu0 0.0
    %719 = vmatprep.subr.mxu0 0.0
    %720 = vmatpush1.msra.mxu0 0.0
    %721 = vmatprep.subr.mxu0 0.0
    %722 = vmatpush1.msra.mxu0 0.0
    %723 = vmatprep.subr.mxu0 0.0
    %724 = vmatpush1.msra.mxu0 0.0
    %725 = vmatprep.subr.mxu0 0.0
    %726 = vmatpush1.msra.mxu0 0.0
    %727 = vmatprep.subr.mxu0 0.0
    %728 = vmatpush1.msra.mxu0 0.0
    %729 = vmatprep.subr.mxu0 0.0
    %730 = vmatpush1.msra.mxu0 0.0
    %731 = vmatprep.subr.mxu0 0.0
    %732 = vmatpush1.msra.mxu0 0.0
    %733 = vmatprep.subr.mxu0 0.0
    %734 = vmatpush1.msra.mxu0 0.0
    %735 = vmatprep.subr.mxu0 0.0
    %736 = vmatpush1.msra.mxu0 0.0
    %737 = vmatprep.subr.mxu0 0.0
    %738 = vmatpush1.msra.mxu0 0.0
    %739 = vmatprep.subr.mxu0 0.0
    %740 = vmatpush1.msra.mxu0 0.0
    %741 = vmatprep.subr.mxu0 0.0
    %742 = vmatpush1.msra.mxu0 %v232
    %743 = vmatprep.subr.mxu0 0.0
    %744 = vmatpush1.msra.mxu0 %v230
    %745 = vmatprep.subr.mxu0 0.0
    %746 = vmatpush2.msra.mxu0 0.0
    %747 = vmatprep.subr.mxu0 0.0
    %748 = vmatpush2.msra.mxu0 0.0
    %749 = vmatprep.subr.mxu0 0.0
    %750 = vmatpush2.msra.mxu0 0.0
    %751 = vmatprep.subr.mxu0 0.0
    %752 = vmatpush2.msra.mxu0 0.0
    %753 = vmatprep.subr.mxu0 0.0
    %754 = vmatpush2.msra.mxu0 0.0
    %755 = vmatprep.subr.mxu0 0.0
    %756 = vmatpush2.msra.mxu0 0.0
    %757 = vmatprep.subr.mxu0 0.0
    %758 = vmatpush2.msra.mxu0 0.0
    %759 = vmatprep.subr.mxu0 0.0
    %760 = vmatpush2.msra.mxu0 0.0
    %761 = vmatprep.subr.mxu0 0.0
    %762 = vmatpush2.msra.mxu0 0.0
    %763 = vmatprep.subr.mxu0 0.0
    %764 = vmatpush2.msra.mxu0 0.0
    %765 = vmatprep.subr.mxu0 0.0
    %766 = vmatpush2.msra.mxu0 0.0
    %767 = vmatprep.subr.mxu0 0.0
    %768 = vmatpush2.msra.mxu0 0.0
    %769 = vmatprep.subr.mxu0 0.0
    %770 = vmatpush2.msra.mxu0 0.0
    %771 = vmatprep.subr.mxu0 0.0
    %772 = vmatpush2.msra.mxu0 0.0
    %773 = vmatprep.subr.mxu0 0.0
    %774 = vmatpush2.msra.mxu0 0.0
    %775 = vmatprep.subr.mxu0 0.0
    %776 = vmatpush2.msra.mxu0 0.0
    %777 = vmatprep.mubr.f32.mxu0 0.0
    %778 = vmatmul.mubr.f32.gmra.mxu0 %v708
    %v779 = vpop.f32.mrf.mxu0
    %v780 = vadd.f32 0.0, %v779
    %v781 = vpop.f32.mrf.mxu0
    %782 = vmatprep.mubr.f32.mxu0 0.0
    %783 = vmatmul.mubr.f32.gmra.mxu0 %v711
    %v784 = vpop.f32.mrf.mxu0
    %v785 = vadd.f32 0.0, %v784
    %v786 = vpop.f32.mrf.mxu0
    %787 = vdwg.mxu0
    %v789 = vsel %vm618, %v701, 0
    %v792 = vsel %vm618, %v702, 0
    %794 = vmatprep.subr.mxu0 0.0
    %795 = vmatpush1.msra.mxu0 0.0
    %796 = vmatprep.subr.mxu0 0.0
    %797 = vmatpush1.msra.mxu0 0.0
    %798 = vmatprep.subr.mxu0 0.0
    %799 = vmatpush1.msra.mxu0 0.0
    %800 = vmatprep.subr.mxu0 0.0
    %801 = vmatpush1.msra.mxu0 0.0
    %802 = vmatprep.subr.mxu0 0.0
    %803 = vmatpush1.msra.mxu0 0.0
    %804 = vmatprep.subr.mxu0 0.0
    %805 = vmatpush1.msra.mxu0 0.0
    %806 = vmatprep.subr.mxu0 0.0
    %807 = vmatpush1.msra.mxu0 0.0
    %808 = vmatprep.subr.mxu0 0.0
    %809 = vmatpush1.msra.mxu0 0.0
    %810 = vmatprep.subr.mxu0 0.0
    %811 = vmatpush1.msra.mxu0 0.0
    %812 = vmatprep.subr.mxu0 0.0
    %813 = vmatpush1.msra.mxu0 0.0
    %814 = vmatprep.subr.mxu0 0.0
    %815 = vmatpush1.msra.mxu0 0.0
    %816 = vmatprep.subr.mxu0 0.0
    %817 = vmatpush1.msra.mxu0 0.0
    %818 = vmatprep.subr.mxu0 0.0
    %819 = vmatpush1.msra.mxu0 0.0
    %820 = vmatprep.subr.mxu0 0.0
    %821 = vmatpush1.msra.mxu0 0.0
    %822 = vmatprep.subr.mxu0 0.0
    %823 = vmatpush1.msra.mxu0 %v238
    %824 = vmatprep.subr.mxu0 0.0
    %825 = vmatpush1.msra.mxu0 %v236
    %826 = vmatprep.subr.mxu0 0.0
    %827 = vmatpush2.msra.mxu0 0.0
    %828 = vmatprep.subr.mxu0 0.0
    %829 = vmatpush2.msra.mxu0 0.0
    %830 = vmatprep.subr.mxu0 0.0
    %831 = vmatpush2.msra.mxu0 0.0
    %832 = vmatprep.subr.mxu0 0.0
    %833 = vmatpush2.msra.mxu0 0.0
    %834 = vmatprep.subr.mxu0 0.0
    %835 = vmatpush2.msra.mxu0 0.0
    %836 = vmatprep.subr.mxu0 0.0
    %837 = vmatpush2.msra.mxu0 0.0
    %838 = vmatprep.subr.mxu0 0.0
    %839 = vmatpush2.msra.mxu0 0.0
    %840 = vmatprep.subr.mxu0 0.0
    %841 = vmatpush2.msra.mxu0 0.0
    %842 = vmatprep.subr.mxu0 0.0
    %843 = vmatpush2.msra.mxu0 0.0
    %844 = vmatprep.subr.mxu0 0.0
    %845 = vmatpush2.msra.mxu0 0.0
    %846 = vmatprep.subr.mxu0 0.0
    %847 = vmatpush2.msra.mxu0 0.0
    %848 = vmatprep.subr.mxu0 0.0
    %849 = vmatpush2.msra.mxu0 0.0
    %850 = vmatprep.subr.mxu0 0.0
    %851 = vmatpush2.msra.mxu0 0.0
    %852 = vmatprep.subr.mxu0 0.0
    %853 = vmatpush2.msra.mxu0 0.0
    %854 = vmatprep.subr.mxu0 0.0
    %855 = vmatpush2.msra.mxu0 0.0
    %856 = vmatprep.subr.mxu0 0.0
    %857 = vmatpush2.msra.mxu0 0.0
    %858 = vmatprep.mubr.f32.mxu0 0.0
    %859 = vmatmul.mubr.f32.gmra.mxu0 %v789
    %v860 = vpop.f32.mrf.mxu0
    %v861 = vadd.f32 0.0, %v860
    %v862 = vpop.f32.mrf.mxu0
    %863 = vmatprep.mubr.f32.mxu0 0.0
    %864 = vmatmul.mubr.f32.gmra.mxu0 %v792
    %v865 = vpop.f32.mrf.mxu0
    %v866 = vadd.f32 0.0, %v865
    %v867 = vpop.f32.mrf.mxu0
    %868 = vdwg.mxu0
    %v870 = vsel %vm618, %v703, 0
    %v873 = vsel %vm618, %v704, 0
    %875 = vmatprep.subr.mxu0 0.0
    %876 = vmatpush1.msra.mxu0 0.0
    %877 = vmatprep.subr.mxu0 0.0
    %878 = vmatpush1.msra.mxu0 0.0
    %879 = vmatprep.subr.mxu0 0.0
    %880 = vmatpush1.msra.mxu0 0.0
    %881 = vmatprep.subr.mxu0 0.0
    %882 = vmatpush1.msra.mxu0 0.0
    %883 = vmatprep.subr.mxu0 0.0
    %884 = vmatpush1.msra.mxu0 0.0
    %885 = vmatprep.subr.mxu0 0.0
    %886 = vmatpush1.msra.mxu0 0.0
    %887 = vmatprep.subr.mxu0 0.0
    %888 = vmatpush1.msra.mxu0 0.0
    %889 = vmatprep.subr.mxu0 0.0
    %890 = vmatpush1.msra.mxu0 0.0
    %891 = vmatprep.subr.mxu0 0.0
    %892 = vmatpush1.msra.mxu0 0.0
    %893 = vmatprep.subr.mxu0 0.0
    %894 = vmatpush1.msra.mxu0 0.0
    %895 = vmatprep.subr.mxu0 0.0
    %896 = vmatpush1.msra.mxu0 0.0
    %897 = vmatprep.subr.mxu0 0.0
    %898 = vmatpush1.msra.mxu0 0.0
    %899 = vmatprep.subr.mxu0 0.0
    %900 = vmatpush1.msra.mxu0 0.0
    %901 = vmatprep.subr.mxu0 0.0
    %902 = vmatpush1.msra.mxu0 0.0
    %903 = vmatprep.subr.mxu0 0.0
    %904 = vmatpush1.msra.mxu0 %v244
    %905 = vmatprep.subr.mxu0 0.0
    %906 = vmatpush1.msra.mxu0 %v242
    %907 = vmatprep.subr.mxu0 0.0
    %908 = vmatpush2.msra.mxu0 0.0
    %909 = vmatprep.subr.mxu0 0.0
    %910 = vmatpush2.msra.mxu0 0.0
    %911 = vmatprep.subr.mxu0 0.0
    %912 = vmatpush2.msra.mxu0 0.0
    %913 = vmatprep.subr.mxu0 0.0
    %914 = vmatpush2.msra.mxu0 0.0
    %915 = vmatprep.subr.mxu0 0.0
    %916 = vmatpush2.msra.mxu0 0.0
    %917 = vmatprep.subr.mxu0 0.0
    %918 = vmatpush2.msra.mxu0 0.0
    %919 = vmatprep.subr.mxu0 0.0
    %920 = vmatpush2.msra.mxu0 0.0
    %921 = vmatprep.subr.mxu0 0.0
    %922 = vmatpush2.msra.mxu0 0.0
    %923 = vmatprep.subr.mxu0 0.0
    %924 = vmatpush2.msra.mxu0 0.0
    %925 = vmatprep.subr.mxu0 0.0
    %926 = vmatpush2.msra.mxu0 0.0
    %927 = vmatprep.subr.mxu0 0.0
    %928 = vmatpush2.msra.mxu0 0.0
    %929 = vmatprep.subr.mxu0 0.0
    %930 = vmatpush2.msra.mxu0 0.0
    %931 = vmatprep.subr.mxu0 0.0
    %932 = vmatpush2.msra.mxu0 0.0
    %933 = vmatprep.subr.mxu0 0.0
    %934 = vmatpush2.msra.mxu0 0.0
    %935 = vmatprep.subr.mxu0 0.0
    %936 = vmatpush2.msra.mxu0 0.0
    %937 = vmatprep.subr.mxu0 0.0
    %938 = vmatpush2.msra.mxu0 0.0
    %939 = vmatprep.mubr.f32.mxu0 0.0
    %940 = vmatmul.mubr.f32.gmra.mxu0 %v870
    %v941 = vpop.f32.mrf.mxu0
    %v942 = vadd.f32 0.0, %v941
    %v943 = vpop.f32.mrf.mxu0
    %944 = vmatprep.mubr.f32.mxu0 0.0
    %945 = vmatmul.mubr.f32.gmra.mxu0 %v873
    %v946 = vpop.f32.mrf.mxu0
    %v947 = vadd.f32 0.0, %v946
    %v948 = vpop.f32.mrf.mxu0
    %949 = vdwg.mxu0
    %v951 = vsel %vm618, %v705, 0
    %v954 = vsel %vm618, %v706, 0
    %956 = vmatprep.subr.mxu0 0.0
    %957 = vmatpush1.msra.mxu0 0.0
    %958 = vmatprep.subr.mxu0 0.0
    %959 = vmatpush1.msra.mxu0 0.0
    %960 = vmatprep.subr.mxu0 0.0
    %961 = vmatpush1.msra.mxu0 0.0
    %962 = vmatprep.subr.mxu0 0.0
    %963 = vmatpush1.msra.mxu0 0.0
    %964 = vmatprep.subr.mxu0 0.0
    %965 = vmatpush1.msra.mxu0 0.0
    %966 = vmatprep.subr.mxu0 0.0
    %967 = vmatpush1.msra.mxu0 0.0
    %968 = vmatprep.subr.mxu0 0.0
    %969 = vmatpush1.msra.mxu0 0.0
    %970 = vmatprep.subr.mxu0 0.0
    %971 = vmatpush1.msra.mxu0 0.0
    %972 = vmatprep.subr.mxu0 0.0
    %973 = vmatpush1.msra.mxu0 0.0
    %974 = vmatprep.subr.mxu0 0.0
    %975 = vmatpush1.msra.mxu0 0.0
    %976 = vmatprep.subr.mxu0 0.0
    %977 = vmatpush1.msra.mxu0 0.0
    %978 = vmatprep.subr.mxu0 0.0
    %979 = vmatpush1.msra.mxu0 0.0
    %980 = vmatprep.subr.mxu0 0.0
    %981 = vmatpush1.msra.mxu0 0.0
    %982 = vmatprep.subr.mxu0 0.0
    %983 = vmatpush1.msra.mxu0 0.0
    %984 = vmatprep.subr.mxu0 0.0
    %985 = vmatpush1.msra.mxu0 %v250
    %986 = vmatprep.subr.mxu0 0.0
    %987 = vmatpush1.msra.mxu0 %v248
    %988 = vmatprep.subr.mxu0 0.0
    %989 = vmatpush2.msra.mxu0 0.0
    %990 = vmatprep.subr.mxu0 0.0
    %991 = vmatpush2.msra.mxu0 0.0
    %992 = vmatprep.subr.mxu0 0.0
    %993 = vmatpush2.msra.mxu0 0.0
    %994 = vmatprep.subr.mxu0 0.0
    %995 = vmatpush2.msra.mxu0 0.0
    %996 = vmatprep.subr.mxu0 0.0
    %997 = vmatpush2.msra.mxu0 0.0
    %998 = vmatprep.subr.mxu0 0.0
    %999 = vmatpush2.msra.mxu0 0.0
    %1000 = vmatprep.subr.mxu0 0.0
    %1001 = vmatpush2.msra.mxu0 0.0
    %1002 = vmatprep.subr.mxu0 0.0
    %1003 = vmatpush2.msra.mxu0 0.0
    %1004 = vmatprep.subr.mxu0 0.0
    %1005 = vmatpush2.msra.mxu0 0.0
    %1006 = vmatprep.subr.mxu0 0.0
    %1007 = vmatpush2.msra.mxu0 0.0
    %1008 = vmatprep.subr.mxu0 0.0
    %1009 = vmatpush2.msra.mxu0 0.0
    %1010 = vmatprep.subr.mxu0 0.0
    %1011 = vmatpush2.msra.mxu0 0.0
    %1012 = vmatprep.subr.mxu0 0.0
    %1013 = vmatpush2.msra.mxu0 0.0
    %1014 = vmatprep.subr.mxu0 0.0
    %1015 = vmatpush2.msra.mxu0 0.0
    %1016 = vmatprep.subr.mxu0 0.0
    %1017 = vmatpush2.msra.mxu0 0.0
    %1018 = vmatprep.subr.mxu0 0.0
    %1019 = vmatpush2.msra.mxu0 0.0
    %1020 = vmatprep.mubr.f32.mxu0 0.0
    %1021 = vmatmul.mubr.f32.gmra.mxu0 %v951
    %v1022 = vpop.f32.mrf.mxu0
    %v1023 = vadd.f32 0.0, %v1022
    %v1024 = vpop.f32.mrf.mxu0
    %1025 = vmatprep.mubr.f32.mxu0 0.0
    %1026 = vmatmul.mubr.f32.gmra.mxu0 %v954
    %v1027 = vpop.f32.mrf.mxu0
    %v1028 = vadd.f32 0.0, %v1027
    %v1029 = vpop.f32.mrf.mxu0
    %1030 = vdwg.mxu0
    %v1031 = vld [vmem:[%s6] sm:$0x1]
    %v1032 = vld [vmem:[%s5] sm:$0xff]
    %v1034 = vsel %vm253, %v780, 0
    %v1037 = vsel %vm253, %v785, 0
    %1039 = vmatprep.subr.mxu0 0.0
    %1040 = vmatpush1.msra.mxu0 0.0
    %1041 = vmatprep.subr.mxu0 0.0
    %1042 = vmatpush1.msra.mxu0 0.0
    %1043 = vmatprep.subr.mxu0 0.0
    %1044 = vmatpush1.msra.mxu0 0.0
    %1045 = vmatprep.subr.mxu0 0.0
    %1046 = vmatpush1.msra.mxu0 0.0
    %1047 = vmatprep.subr.mxu0 0.0
    %1048 = vmatpush1.msra.mxu0 0.0
    %1049 = vmatprep.subr.mxu0 0.0
    %1050 = vmatpush1.msra.mxu0 0.0
    %1051 = vmatprep.subr.mxu0 0.0
    %1052 = vmatpush1.msra.mxu0 0.0
    %1053 = vmatprep.subr.mxu0 0.0
    %1054 = vmatpush1.msra.mxu0 0.0
    %1055 = vmatprep.subr.mxu0 0.0
    %1056 = vmatpush1.msra.mxu0 0.0
    %1057 = vmatprep.subr.mxu0 0.0
    %1058 = vmatpush1.msra.mxu0 0.0
    %1059 = vmatprep.subr.mxu0 0.0
    %1060 = vmatpush1.msra.mxu0 0.0
    %1061 = vmatprep.subr.mxu0 0.0
    %1062 = vmatpush1.msra.mxu0 0.0
    %1063 = vmatprep.subr.mxu0 0.0
    %1064 = vmatpush1.msra.mxu0 0.0
    %1065 = vmatprep.subr.mxu0 0.0
    %1066 = vmatpush1.msra.mxu0 0.0
    %1067 = vmatprep.subr.mxu0 0.0
    %1068 = vmatpush1.msra.mxu0 0.0
    %1069 = vmatprep.subr.mxu0 0.0
    %1070 = vmatpush1.msra.mxu0 %v1032
    %1071 = vmatprep.subr.mxu0 0.0
    %1072 = vmatpush2.msra.mxu0 0.0
    %1073 = vmatprep.subr.mxu0 0.0
    %1074 = vmatpush2.msra.mxu0 0.0
    %1075 = vmatprep.subr.mxu0 0.0
    %1076 = vmatpush2.msra.mxu0 0.0
    %1077 = vmatprep.subr.mxu0 0.0
    %1078 = vmatpush2.msra.mxu0 0.0
    %1079 = vmatprep.subr.mxu0 0.0
    %1080 = vmatpush2.msra.mxu0 0.0
    %1081 = vmatprep.subr.mxu0 0.0
    %1082 = vmatpush2.msra.mxu0 0.0
    %1083 = vmatprep.subr.mxu0 0.0
    %1084 = vmatpush2.msra.mxu0 0.0
    %1085 = vmatprep.subr.mxu0 0.0
    %1086 = vmatpush2.msra.mxu0 0.0
    %1087 = vmatprep.subr.mxu0 0.0
    %1088 = vmatpush2.msra.mxu0 0.0
    %1089 = vmatprep.subr.mxu0 0.0
    %1090 = vmatpush2.msra.mxu0 0.0
    %1091 = vmatprep.subr.mxu0 0.0
    %1092 = vmatpush2.msra.mxu0 0.0
    %1093 = vmatprep.subr.mxu0 0.0
    %1094 = vmatpush2.msra.mxu0 0.0
    %1095 = vmatprep.subr.mxu0 0.0
    %1096 = vmatpush2.msra.mxu0 0.0
    %1097 = vmatprep.subr.mxu0 0.0
    %1098 = vmatpush2.msra.mxu0 0.0
    %1099 = vmatprep.subr.mxu0 0.0
    %1100 = vmatpush2.msra.mxu0 0.0
    %1101 = vmatprep.subr.mxu0 0.0
    %1102 = vmatpush2.msra.mxu0 0.0
    %1103 = vmatprep.mubr.f32.mxu0 0.0
    %1104 = vmatmul.mubr.f32.gmra.mxu0 %v1034
    %v1105 = vpop.f32.mrf.mxu0
    %v1106 = vadd.f32 0.0, %v1105
    %v1107 = vpop.f32.mrf.mxu0
    %1108 = vmatprep.mubr.f32.mxu0 0.0
    %1109 = vmatmul.mubr.f32.gmra.mxu0 %v1037
    %v1110 = vpop.f32.mrf.mxu0
    %v1111 = vadd.f32 0.0, %v1110
    %v1112 = vpop.f32.mrf.mxu0
    %1113 = vdwg.mxu0
    %v1115 = vlaneseq
    %v1116 = vshrl.u32 %v1115, 7
    %v1117 = vsub.s32 0, %v1116
    %v1118 = vrot.slane %v1031, %v1117
    %v1120 = vadd.f32 %v1118, %v1106
    %v1121 = vadd.f32 %v1118, %v1111
    %v1122 = vld [vmem:[%s5 + $0x8] sm:$0xff]
    %v1124 = vsel %vm253, %v861, 0
    %v1127 = vsel %vm253, %v866, 0
    %1129 = vmatprep.subr.mxu0 0.0
    %1130 = vmatpush1.msra.mxu0 0.0
    %1131 = vmatprep.subr.mxu0 0.0
    %1132 = vmatpush1.msra.mxu0 0.0
    %1133 = vmatprep.subr.mxu0 0.0
    %1134 = vmatpush1.msra.mxu0 0.0
    %1135 = vmatprep.subr.mxu0 0.0
    %1136 = vmatpush1.msra.mxu0 0.0
    %1137 = vmatprep.subr.mxu0 0.0
    %1138 = vmatpush1.msra.mxu0 0.0
    %1139 = vmatprep.subr.mxu0 0.0
    %1140 = vmatpush1.msra.mxu0 0.0
    %1141 = vmatprep.subr.mxu0 0.0
    %1142 = vmatpush1.msra.mxu0 0.0
    %1143 = vmatprep.subr.mxu0 0.0
    %1144 = vmatpush1.msra.mxu0 0.0
    %1145 = vmatprep.subr.mxu0 0.0
    %1146 = vmatpush1.msra.mxu0 0.0
    %1147 = vmatprep.subr.mxu0 0.0
    %1148 = vmatpush1.msra.mxu0 0.0
    %1149 = vmatprep.subr.mxu0 0.0
    %1150 = vmatpush1.msra.mxu0 0.0
    %1151 = vmatprep.subr.mxu0 0.0
    %1152 = vmatpush1.msra.mxu0 0.0
    %1153 = vmatprep.subr.mxu0 0.0
    %1154 = vmatpush1.msra.mxu0 0.0
    %1155 = vmatprep.subr.mxu0 0.0
    %1156 = vmatpush1.msra.mxu0 0.0
    %1157 = vmatprep.subr.mxu0 0.0
    %1158 = vmatpush1.msra.mxu0 0.0
    %1159 = vmatprep.subr.mxu0 0.0
    %1160 = vmatpush1.msra.mxu0 %v1122
    %1161 = vmatprep.subr.mxu0 0.0
    %1162 = vmatpush2.msra.mxu0 0.0
    %1163 = vmatprep.subr.mxu0 0.0
    %1164 = vmatpush2.msra.mxu0 0.0
    %1165 = vmatprep.subr.mxu0 0.0
    %1166 = vmatpush2.msra.mxu0 0.0
    %1167 = vmatprep.subr.mxu0 0.0
    %1168 = vmatpush2.msra.mxu0 0.0
    %1169 = vmatprep.subr.mxu0 0.0
    %1170 = vmatpush2.msra.mxu0 0.0
    %1171 = vmatprep.subr.mxu0 0.0
    %1172 = vmatpush2.msra.mxu0 0.0
    %1173 = vmatprep.subr.mxu0 0.0
    %1174 = vmatpush2.msra.mxu0 0.0
    %1175 = vmatprep.subr.mxu0 0.0
    %1176 = vmatpush2.msra.mxu0 0.0
    %1177 = vmatprep.subr.mxu0 0.0
    %1178 = vmatpush2.msra.mxu0 0.0
    %1179 = vmatprep.subr.mxu0 0.0
    %1180 = vmatpush2.msra.mxu0 0.0
    %1181 = vmatprep.subr.mxu0 0.0
    %1182 = vmatpush2.msra.mxu0 0.0
    %1183 = vmatprep.subr.mxu0 0.0
    %1184 = vmatpush2.msra.mxu0 0.0
    %1185 = vmatprep.subr.mxu0 0.0
    %1186 = vmatpush2.msra.mxu0 0.0
    %1187 = vmatprep.subr.mxu0 0.0
    %1188 = vmatpush2.msra.mxu0 0.0
    %1189 = vmatprep.subr.mxu0 0.0
    %1190 = vmatpush2.msra.mxu0 0.0
    %1191 = vmatprep.subr.mxu0 0.0
    %1192 = vmatpush2.msra.mxu0 0.0
    %1193 = vmatprep.mubr.f32.mxu0 0.0
    %1194 = vmatmul.mubr.f32.gmra.mxu0 %v1124
    %v1195 = vpop.f32.mrf.mxu0
    %v1196 = vadd.f32 0.0, %v1195
    %v1197 = vpop.f32.mrf.mxu0
    %1198 = vmatprep.mubr.f32.mxu0 0.0
    %1199 = vmatmul.mubr.f32.gmra.mxu0 %v1127
    %v1200 = vpop.f32.mrf.mxu0
    %v1201 = vadd.f32 0.0, %v1200
    %v1202 = vpop.f32.mrf.mxu0
    %1203 = vdwg.mxu0
    %v1204 = vadd.f32 %v1120, %v1196
    %v1205 = vadd.f32 %v1121, %v1201
    %v1206 = vld [vmem:[%s5 + $0x10] sm:$0xff]
    %v1208 = vsel %vm253, %v942, 0
    %v1211 = vsel %vm253, %v947, 0
    %1213 = vmatprep.subr.mxu0 0.0
    %1214 = vmatpush1.msra.mxu0 0.0
    %1215 = vmatprep.subr.mxu0 0.0
    %1216 = vmatpush1.msra.mxu0 0.0
    %1217 = vmatprep.subr.mxu0 0.0
    %1218 = vmatpush1.msra.mxu0 0.0
    %1219 = vmatprep.subr.mxu0 0.0
    %1220 = vmatpush1.msra.mxu0 0.0
    %1221 = vmatprep.subr.mxu0 0.0
    %1222 = vmatpush1.msra.mxu0 0.0
    %1223 = vmatprep.subr.mxu0 0.0
    %1224 = vmatpush1.msra.mxu0 0.0
    %1225 = vmatprep.subr.mxu0 0.0
    %1226 = vmatpush1.msra.mxu0 0.0
    %1227 = vmatprep.subr.mxu0 0.0
    %1228 = vmatpush1.msra.mxu0 0.0
    %1229 = vmatprep.subr.mxu0 0.0
    %1230 = vmatpush1.msra.mxu0 0.0
    %1231 = vmatprep.subr.mxu0 0.0
    %1232 = vmatpush1.msra.mxu0 0.0
    %1233 = vmatprep.subr.mxu0 0.0
    %1234 = vmatpush1.msra.mxu0 0.0
    %1235 = vmatprep.subr.mxu0 0.0
    %1236 = vmatpush1.msra.mxu0 0.0
    %1237 = vmatprep.subr.mxu0 0.0
    %1238 = vmatpush1.msra.mxu0 0.0
    %1239 = vmatprep.subr.mxu0 0.0
    %1240 = vmatpush1.msra.mxu0 0.0
    %1241 = vmatprep.subr.mxu0 0.0
    %1242 = vmatpush1.msra.mxu0 0.0
    %1243 = vmatprep.subr.mxu0 0.0
    %1244 = vmatpush1.msra.mxu0 %v1206
    %1245 = vmatprep.subr.mxu0 0.0
    %1246 = vmatpush2.msra.mxu0 0.0
    %1247 = vmatprep.subr.mxu0 0.0
    %1248 = vmatpush2.msra.mxu0 0.0
    %1249 = vmatprep.subr.mxu0 0.0
    %1250 = vmatpush2.msra.mxu0 0.0
    %1251 = vmatprep.subr.mxu0 0.0
    %1252 = vmatpush2.msra.mxu0 0.0
    %1253 = vmatprep.subr.mxu0 0.0
    %1254 = vmatpush2.msra.mxu0 0.0
    %1255 = vmatprep.subr.mxu0 0.0
    %1256 = vmatpush2.msra.mxu0 0.0
    %1257 = vmatprep.subr.mxu0 0.0
    %1258 = vmatpush2.msra.mxu0 0.0
    %1259 = vmatprep.subr.mxu0 0.0
    %1260 = vmatpush2.msra.mxu0 0.0
    %1261 = vmatprep.subr.mxu0 0.0
    %1262 = vmatpush2.msra.mxu0 0.0
    %1263 = vmatprep.subr.mxu0 0.0
    %1264 = vmatpush2.msra.mxu0 0.0
    %1265 = vmatprep.subr.mxu0 0.0
    %1266 = vmatpush2.msra.mxu0 0.0
    %1267 = vmatprep.subr.mxu0 0.0
    %1268 = vmatpush2.msra.mxu0 0.0
    %1269 = vmatprep.subr.mxu0 0.0
    %1270 = vmatpush2.msra.mxu0 0.0
    %1271 = vmatprep.subr.mxu0 0.0
    %1272 = vmatpush2.msra.mxu0 0.0
    %1273 = vmatprep.subr.mxu0 0.0
    %1274 = vmatpush2.msra.mxu0 0.0
    %1275 = vmatprep.subr.mxu0 0.0
    %1276 = vmatpush2.msra.mxu0 0.0
    %1277 = vmatprep.mubr.f32.mxu0 0.0
    %1278 = vmatmul.mubr.f32.gmra.mxu0 %v1208
    %v1279 = vpop.f32.mrf.mxu0
    %v1280 = vadd.f32 0.0, %v1279
    %v1281 = vpop.f32.mrf.mxu0
    %1282 = vmatprep.mubr.f32.mxu0 0.0
    %1283 = vmatmul.mubr.f32.gmra.mxu0 %v1211
    %v1284 = vpop.f32.mrf.mxu0
    %v1285 = vadd.f32 0.0, %v1284
    %v1286 = vpop.f32.mrf.mxu0
    %1287 = vdwg.mxu0
    %v1288 = vadd.f32 %v1204, %v1280
    %v1289 = vadd.f32 %v1205, %v1285
    %v1290 = vld [vmem:[%s5 + $0x18] sm:$0xff]
    %v1292 = vsel %vm253, %v1023, 0
    %v1295 = vsel %vm253, %v1028, 0
    %1297 = vmatprep.subr.mxu0 0.0
    %1298 = vmatpush1.msra.mxu0 0.0
    %1299 = vmatprep.subr.mxu0 0.0
    %1300 = vmatpush1.msra.mxu0 0.0
    %1301 = vmatprep.subr.mxu0 0.0
    %1302 = vmatpush1.msra.mxu0 0.0
    %1303 = vmatprep.subr.mxu0 0.0
    %1304 = vmatpush1.msra.mxu0 0.0
    %1305 = vmatprep.subr.mxu0 0.0
    %1306 = vmatpush1.msra.mxu0 0.0
    %1307 = vmatprep.subr.mxu0 0.0
    %1308 = vmatpush1.msra.mxu0 0.0
    %1309 = vmatprep.subr.mxu0 0.0
    %1310 = vmatpush1.msra.mxu0 0.0
    %1311 = vmatprep.subr.mxu0 0.0
    %1312 = vmatpush1.msra.mxu0 0.0
    %1313 = vmatprep.subr.mxu0 0.0
    %1314 = vmatpush1.msra.mxu0 0.0
    %1315 = vmatprep.subr.mxu0 0.0
    %1316 = vmatpush1.msra.mxu0 0.0
    %1317 = vmatprep.subr.mxu0 0.0
    %1318 = vmatpush1.msra.mxu0 0.0
    %1319 = vmatprep.subr.mxu0 0.0
    %1320 = vmatpush1.msra.mxu0 0.0
    %1321 = vmatprep.subr.mxu0 0.0
    %1322 = vmatpush1.msra.mxu0 0.0
    %1323 = vmatprep.subr.mxu0 0.0
    %1324 = vmatpush1.msra.mxu0 0.0
    %1325 = vmatprep.subr.mxu0 0.0
    %1326 = vmatpush1.msra.mxu0 0.0
    %1327 = vmatprep.subr.mxu0 0.0
    %1328 = vmatpush1.msra.mxu0 %v1290
    %1329 = vmatprep.subr.mxu0 0.0
    %1330 = vmatpush2.msra.mxu0 0.0
    %1331 = vmatprep.subr.mxu0 0.0
    %1332 = vmatpush2.msra.mxu0 0.0
    %1333 = vmatprep.subr.mxu0 0.0
    %1334 = vmatpush2.msra.mxu0 0.0
    %1335 = vmatprep.subr.mxu0 0.0
    %1336 = vmatpush2.msra.mxu0 0.0
    %1337 = vmatprep.subr.mxu0 0.0
    %1338 = vmatpush2.msra.mxu0 0.0
    %1339 = vmatprep.subr.mxu0 0.0
    %1340 = vmatpush2.msra.mxu0 0.0
    %1341 = vmatprep.subr.mxu0 0.0
    %1342 = vmatpush2.msra.mxu0 0.0
    %1343 = vmatprep.subr.mxu0 0.0
    %1344 = vmatpush2.msra.mxu0 0.0
    %1345 = vmatprep.subr.mxu0 0.0
    %1346 = vmatpush2.msra.mxu0 0.0
    %1347 = vmatprep.subr.mxu0 0.0
    %1348 = vmatpush2.msra.mxu0 0.0
    %1349 = vmatprep.subr.mxu0 0.0
    %1350 = vmatpush2.msra.mxu0 0.0
    %1351 = vmatprep.subr.mxu0 0.0
    %1352 = vmatpush2.msra.mxu0 0.0
    %1353 = vmatprep.subr.mxu0 0.0
    %1354 = vmatpush2.msra.mxu0 0.0
    %1355 = vmatprep.subr.mxu0 0.0
    %1356 = vmatpush2.msra.mxu0 0.0
    %1357 = vmatprep.subr.mxu0 0.0
    %1358 = vmatpush2.msra.mxu0 0.0
    %1359 = vmatprep.subr.mxu0 0.0
    %1360 = vmatpush2.msra.mxu0 0.0
    %1361 = vmatprep.mubr.f32.mxu0 0.0
    %1362 = vmatmul.mubr.f32.gmra.mxu0 %v1292
    %v1363 = vpop.f32.mrf.mxu0
    %v1364 = vadd.f32 0.0, %v1363
    %v1365 = vpop.f32.mrf.mxu0
    %1366 = vmatprep.mubr.f32.mxu0 0.0
    %1367 = vmatmul.mubr.f32.gmra.mxu0 %v1295
    %v1368 = vpop.f32.mrf.mxu0
    %v1369 = vadd.f32 0.0, %v1368
    %v1370 = vpop.f32.mrf.mxu0
    %1371 = vdwg.mxu0
    %v1372 = vadd.f32 %v1288, %v1364
    %v1373 = vadd.f32 %v1289, %v1369
    %v1374 = vadd.f32 %v105, %v1372
    %v1375 = vadd.f32 %v106, %v1373
    %v1376 = vsel %vm61, %v1374, 0.0
    %1377 = vadd.xlane.f32.xlu0 %v1376
    %v1378 = vpop.xlane.xlu0 %1377
    %v1379 = vsel %vm61, %v1375, 0.0
    %1380 = vadd.xlane.f32.xlu0 %v1379
    %v1381 = vpop.xlane.xlu0 %1380
    %v1382 = vmul.f32 %v1378, %v68
    %v1383 = vmul.f32 %v1381, %v68
    %v1384 = vsub.f32 %v1374, %v1382
    %v1385 = vsub.f32 %v1375, %v1383
    %v1386 = vmul.f32 %v1384, %v1384
    %v1387 = vmul.f32 %v1385, %v1385
    %v1388 = vsel %vm61, %v1386, 0.0
    %1389 = vadd.xlane.f32.xlu0 %v1388
    %v1390 = vpop.xlane.xlu0 %1389
    %v1391 = vsel %vm61, %v1387, 0.0
    %1392 = vadd.xlane.f32.xlu0 %v1391
    %v1393 = vpop.xlane.xlu0 %1392
    %v1394 = vmul.f32 %v1390, %v68
    %v1395 = vmul.f32 %v1393, %v68
    %v1396 = vadd.f32 %v1394, 1e-05
    %v1397 = vadd.f32 %v1395, 1e-05
    %v1398 = vrsqrt.pop %v1396
    %v1399 = vrsqrt.pop %v1397
    %v1400 = vmul.f32 %v1384, %v1398
    %v1401 = vmul.f32 %v1385, %v1399
    %v1402 = vld [vmem:[%s7] sm:$0x1]
    %v1404 = vlaneseq
    %v1405 = vshrl.u32 %v1404, 7
    %v1406 = vsub.s32 0, %v1405
    %v1407 = vrot.slane %v1402, %v1406
    %v1409 = vmul.f32 %v1400, %v1407
    %v1410 = vmul.f32 %v1401, %v1407
    %v1411 = vld [vmem:[%s8] sm:$0x1]
    %v1413 = vlaneseq
    %v1414 = vshrl.u32 %v1413, 7
    %v1415 = vsub.s32 0, %v1414
    %v1416 = vrot.slane %v1411, %v1415
    %v1418 = vadd.f32 %v1409, %v1416
    %v1419 = vadd.f32 %v1410, %v1416
    %v1420 = vld [vmem:[%s9] sm:$0xff]
    %v1421 = vld [vmem:[%s9 + $0x8] sm:$0xff]
    %v1422 = vld [vmem:[%s9 + $0x10] sm:$0xff]
    %v1423 = vld [vmem:[%s9 + $0x18] sm:$0xff]
    %v1424 = vld [vmem:[%s10] sm:$0x1]
    %v1426 = vlaneseq
    %v1427 = vshrl.u32 %v1426, 7
    %v1428 = vsub.s32 0, %v1427
    %v1429 = vrot.slane %v1424, %v1428
    %v1432 = vsel %vm61, %v1418, 0
    %v1435 = vsel %vm61, %v1419, 0
    %1437 = vmatprep.subr.mxu0 0.0
    %1438 = vmatpush1.msra.mxu0 0.0
    %1439 = vmatprep.subr.mxu0 0.0
    %1440 = vmatpush1.msra.mxu0 0.0
    %1441 = vmatprep.subr.mxu0 0.0
    %1442 = vmatpush1.msra.mxu0 0.0
    %1443 = vmatprep.subr.mxu0 0.0
    %1444 = vmatpush1.msra.mxu0 0.0
    %1445 = vmatprep.subr.mxu0 0.0
    %1446 = vmatpush1.msra.mxu0 0.0
    %1447 = vmatprep.subr.mxu0 0.0
    %1448 = vmatpush1.msra.mxu0 0.0
    %1449 = vmatprep.subr.mxu0 0.0
    %1450 = vmatpush1.msra.mxu0 0.0
    %1451 = vmatprep.subr.mxu0 0.0
    %1452 = vmatpush1.msra.mxu0 0.0
    %1453 = vmatprep.subr.mxu0 0.0
    %1454 = vmatpush1.msra.mxu0 0.0
    %1455 = vmatprep.subr.mxu0 0.0
    %1456 = vmatpush1.msra.mxu0 0.0
    %1457 = vmatprep.subr.mxu0 0.0
    %1458 = vmatpush1.msra.mxu0 0.0
    %1459 = vmatprep.subr.mxu0 0.0
    %1460 = vmatpush1.msra.mxu0 0.0
    %1461 = vmatprep.subr.mxu0 0.0
    %1462 = vmatpush1.msra.mxu0 %v1423
    %1463 = vmatprep.subr.mxu0 0.0
    %1464 = vmatpush1.msra.mxu0 %v1422
    %1465 = vmatprep.subr.mxu0 0.0
    %1466 = vmatpush1.msra.mxu0 %v1421
    %1467 = vmatprep.subr.mxu0 0.0
    %1468 = vmatpush1.msra.mxu0 %v1420
    %1469 = vmatprep.subr.mxu0 0.0
    %1470 = vmatpush2.msra.mxu0 0.0
    %1471 = vmatprep.subr.mxu0 0.0
    %1472 = vmatpush2.msra.mxu0 0.0
    %1473 = vmatprep.subr.mxu0 0.0
    %1474 = vmatpush2.msra.mxu0 0.0
    %1475 = vmatprep.subr.mxu0 0.0
    %1476 = vmatpush2.msra.mxu0 0.0
    %1477 = vmatprep.subr.mxu0 0.0
    %1478 = vmatpush2.msra.mxu0 0.0
    %1479 = vmatprep.subr.mxu0 0.0
    %1480 = vmatpush2.msra.mxu0 0.0
    %1481 = vmatprep.subr.mxu0 0.0
    %1482 = vmatpush2.msra.mxu0 0.0
    %1483 = vmatprep.subr.mxu0 0.0
    %1484 = vmatpush2.msra.mxu0 0.0
    %1485 = vmatprep.subr.mxu0 0.0
    %1486 = vmatpush2.msra.mxu0 0.0
    %1487 = vmatprep.subr.mxu0 0.0
    %1488 = vmatpush2.msra.mxu0 0.0
    %1489 = vmatprep.subr.mxu0 0.0
    %1490 = vmatpush2.msra.mxu0 0.0
    %1491 = vmatprep.subr.mxu0 0.0
    %1492 = vmatpush2.msra.mxu0 0.0
    %1493 = vmatprep.subr.mxu0 0.0
    %1494 = vmatpush2.msra.mxu0 0.0
    %1495 = vmatprep.subr.mxu0 0.0
    %1496 = vmatpush2.msra.mxu0 0.0
    %1497 = vmatprep.subr.mxu0 0.0
    %1498 = vmatpush2.msra.mxu0 0.0
    %1499 = vmatprep.subr.mxu0 0.0
    %1500 = vmatpush2.msra.mxu0 0.0
    %1501 = vmatprep.mubr.f32.mxu0 0.0
    %1502 = vmatmul.mubr.f32.gmra.mxu0 %v1432
    %v1503 = vpop.f32.mrf.mxu0
    %v1504 = vadd.f32 %v1429, %v1503
    %v1505 = vpop.f32.mrf.mxu0
    %1506 = vmatprep.mubr.f32.mxu0 0.0
    %1507 = vmatmul.mubr.f32.gmra.mxu0 %v1435
    %v1508 = vpop.f32.mrf.mxu0
    %v1509 = vadd.f32 %v1429, %v1508
    %v1510 = vpop.f32.mrf.mxu0
    %1511 = vdwg.mxu0
    %v1512 = vmul.f32 %v1504, 0.5
    %v1513 = vmul.f32 %v1509, 0.5
    %v1514 = vmul.f32 %v1504, 0.70710677
    %v1515 = vmul.f32 %v1509, 0.70710677
    %v1516 = vand.u32 2147483647, %v1514
    %v1517 = vand.u32 2147483647, %v1515
    %v1518 = vmul.f32 %v1516, 0.3275911
    %v1519 = vmul.f32 %v1517, 0.3275911
    %v1520 = vadd.f32 %v1518, 1.0
    %v1521 = vadd.f32 %v1519, 1.0
    %v1522 = vrcp.pop %v1520
    %v1523 = vmul.f32 1.0, %v1522
    %v1524 = vrcp.pop %v1521
    %v1525 = vmul.f32 1.0, %v1524
    %v1526 = vmul.f32 %v1523, 1.0614054
    %v1527 = vmul.f32 %v1525, 1.0614054
    %v1528 = vadd.f32 %v1526, -1.4531521
    %v1529 = vadd.f32 %v1527, -1.4531521
    %v1530 = vmul.f32 %v1528, %v1523
    %v1531 = vmul.f32 %v1529, %v1525
    %v1532 = vadd.f32 %v1530, 1.4214138
    %v1533 = vadd.f32 %v1531, 1.4214138
    %v1534 = vmul.f32 %v1532, %v1523
    %v1535 = vmul.f32 %v1533, %v1525
    %v1536 = vadd.f32 %v1534, -0.28449672
    %v1537 = vadd.f32 %v1535, -0.28449672
    %v1538 = vmul.f32 %v1536, %v1523
    %v1539 = vmul.f32 %v1537, %v1525
    %v1540 = vadd.f32 %v1538, 0.2548296
    %v1541 = vadd.f32 %v1539, 0.2548296
    %v1542 = vmul.f32 %v1540, %v1523
    %v1543 = vmul.f32 %v1541, %v1525
    %v1544 = vsub.f32 0.0, %v1516
    %v1545 = vsub.f32 0.0, %v1517
    %v1546 = vmul.f32 %v1544, %v1516
    %v1547 = vmul.f32 %v1545, %v1517
    %v1548 = vmul.f32 %v1546, 1.442695
    %v1549 = vpow.pop %v1548
    %v1550 = vmul.f32 %v1547, 1.442695
    %v1551 = vpow.pop %v1550
    %v1552 = vmul.f32 %v1542, %v1549
    %v1553 = vmul.f32 %v1543, %v1551
    %v1554 = vsub.f32 1.0, %v1552
    %v1555 = vsub.f32 1.0, %v1553
    %vm1556 = vcmp.ge.f32.partialorder %v1514, 0.0
    %vm1557 = vcmp.ge.f32.partialorder %v1515, 0.0
    %v1558 = vsub.f32 0.0, %v1554
    %v1559 = vsub.f32 0.0, %v1555
    %v1560 = vsel %vm1556, %v1554, %v1558
    %v1561 = vsel %vm1557, %v1555, %v1559
    %v1562 = vadd.f32 %v1560, 1.0
    %v1563 = vadd.f32 %v1561, 1.0
    %v1564 = vmul.f32 %v1512, %v1562
    %v1565 = vmul.f32 %v1513, %v1563
    %v1566 = vld [vmem:[%s11] sm:$0xff]
    %v1567 = vld [vmem:[%s11 + $0x8] sm:$0xff]
    %v1568 = vld [vmem:[%s11 + $0x10] sm:$0xff]
    %v1569 = vld [vmem:[%s11 + $0x18] sm:$0xff]
    %v1570 = vld [vmem:[%s11 + $0x20] sm:$0xff]
    %v1571 = vld [vmem:[%s11 + $0x28] sm:$0xff]
    %v1572 = vld [vmem:[%s11 + $0x30] sm:$0xff]
    %v1573 = vld [vmem:[%s11 + $0x38] sm:$0xff]
    %v1574 = vld [vmem:[%s12] sm:$0x1]
    %v1576 = vlaneseq
    %v1577 = vshrl.u32 %v1576, 7
    %v1578 = vsub.s32 0, %v1577
    %v1579 = vrot.slane %v1574, %v1578
    %vm1581 = vcmask 523264
    %v1583 = vsel %vm1581, %v1564, 0
    %v1586 = vsel %vm1581, %v1565, 0
    %1588 = vmatprep.subr.mxu0 0.0
    %1589 = vmatpush1.msra.mxu0 0.0
    %1590 = vmatprep.subr.mxu0 0.0
    %1591 = vmatpush1.msra.mxu0 0.0
    %1592 = vmatprep.subr.mxu0 0.0
    %1593 = vmatpush1.msra.mxu0 0.0
    %1594 = vmatprep.subr.mxu0 0.0
    %1595 = vmatpush1.msra.mxu0 0.0
    %1596 = vmatprep.subr.mxu0 0.0
    %1597 = vmatpush1.msra.mxu0 0.0
    %1598 = vmatprep.subr.mxu0 0.0
    %1599 = vmatpush1.msra.mxu0 0.0
    %1600 = vmatprep.subr.mxu0 0.0
    %1601 = vmatpush1.msra.mxu0 0.0
    %1602 = vmatprep.subr.mxu0 0.0
    %1603 = vmatpush1.msra.mxu0 0.0
    %1604 = vmatprep.subr.mxu0 0.0
    %1605 = vmatpush1.msra.mxu0 %v1573
    %1606 = vmatprep.subr.mxu0 0.0
    %1607 = vmatpush1.msra.mxu0 %v1572
    %1608 = vmatprep.subr.mxu0 0.0
    %1609 = vmatpush1.msra.mxu0 %v1571
    %1610 = vmatprep.subr.mxu0 0.0
    %1611 = vmatpush1.msra.mxu0 %v1570
    %1612 = vmatprep.subr.mxu0 0.0
    %1613 = vmatpush1.msra.mxu0 %v1569
    %1614 = vmatprep.subr.mxu0 0.0
    %1615 = vmatpush1.msra.mxu0 %v1568
    %1616 = vmatprep.subr.mxu0 0.0
    %1617 = vmatpush1.msra.mxu0 %v1567
    %1618 = vmatprep.subr.mxu0 0.0
    %1619 = vmatpush1.msra.mxu0 %v1566
    %1620 = vmatprep.subr.mxu0 0.0
    %1621 = vmatpush2.msra.mxu0 0.0
    %1622 = vmatprep.subr.mxu0 0.0
    %1623 = vmatpush2.msra.mxu0 0.0
    %1624 = vmatprep.subr.mxu0 0.0
    %1625 = vmatpush2.msra.mxu0 0.0
    %1626 = vmatprep.subr.mxu0 0.0
    %1627 = vmatpush2.msra.mxu0 0.0
    %1628 = vmatprep.subr.mxu0 0.0
    %1629 = vmatpush2.msra.mxu0 0.0
    %1630 = vmatprep.subr.mxu0 0.0
    %1631 = vmatpush2.msra.mxu0 0.0
    %1632 = vmatprep.subr.mxu0 0.0
    %1633 = vmatpush2.msra.mxu0 0.0
    %1634 = vmatprep.subr.mxu0 0.0
    %1635 = vmatpush2.msra.mxu0 0.0
    %1636 = vmatprep.subr.mxu0 0.0
    %1637 = vmatpush2.msra.mxu0 0.0
    %1638 = vmatprep.subr.mxu0 0.0
    %1639 = vmatpush2.msra.mxu0 0.0
    %1640 = vmatprep.subr.mxu0 0.0
    %1641 = vmatpush2.msra.mxu0 0.0
    %1642 = vmatprep.subr.mxu0 0.0
    %1643 = vmatpush2.msra.mxu0 0.0
    %1644 = vmatprep.subr.mxu0 0.0
    %1645 = vmatpush2.msra.mxu0 0.0
    %1646 = vmatprep.subr.mxu0 0.0
    %1647 = vmatpush2.msra.mxu0 0.0
    %1648 = vmatprep.subr.mxu0 0.0
    %1649 = vmatpush2.msra.mxu0 0.0
    %1650 = vmatprep.subr.mxu0 0.0
    %1651 = vmatpush2.msra.mxu0 0.0
    %1652 = vmatprep.mubr.f32.mxu0 0.0
    %1653 = vmatmul.mubr.f32.gmra.mxu0 %v1583
    %v1654 = vpop.f32.mrf.mxu0
    %v1655 = vadd.f32 %v1579, %v1654
    %v1656 = vpop.f32.mrf.mxu0
    %1657 = vmatprep.mubr.f32.mxu0 0.0
    %1658 = vmatmul.mubr.f32.gmra.mxu0 %v1586
    %v1659 = vpop.f32.mrf.mxu0
    %v1660 = vadd.f32 %v1579, %v1659
    %v1661 = vpop.f32.mrf.mxu0
    %1662 = vdwg.mxu0
    %v1663 = vadd.f32 %v1374, %v1655
    %v1664 = vadd.f32 %v1375, %v1660
    %1665 = vst.msk [vmem:[#allocation5] sm:$0xff] %vm61, %v1663
    %1666 = vst.msk [vmem:[#allocation5 + $0x8] sm:$0xff] %vm61, %v1664
    // Predicated region
    $region58: #{tpu_custom_call.1} parent=1 // pred_check
      _
    $region59: #{tpu_custom_call.1} parent=1 // pred_check_branch
      %1668 = sbr.rel (0) target = $region61
    $region60: #{tpu_custom_call.1} parent=1 // pred_region
      %s1670 = ssub.s32 256, 256
      %1671 = vsyncadd [#allocation4], %s1670
      %s1672 = sshll.u32 [#allocation5], 4
      %s1673 = int_to_ptr.vmem [resolvable:$true] %s1672
      %1678 = dma.vmem_to_hbm [thread:$0]  %s1673, 256, %s13, [#allocation4], 128, 128, 8
    $region61: #{tpu_custom_call.1} parent=1 // pred_fallthru
      _
    // Predicated region
    $region62: #{tpu_custom_call.1} parent=1 // pred_check
      _
    $region63: #{tpu_custom_call.1} parent=1 // pred_check_branch
      %1680 = sbr.rel (0) target = $region65
    $region64: #{tpu_custom_call.1} parent=1 // pred_region
      %1681 = dma.done [#allocation4], 256
    $region65: #{tpu_custom_call.1} parent=1 // pred_fallthru
      _
    %1682 = vsyncpa [#allocation3], 1
    %1683 = vsyncpa [#allocation4], 1

</llo_original>
